<compile_context>
chip_gen: v5e
topology: v5e:2x2
jax: 0.10.0
libtpu: 0.0.40
codegen_flags: <defaults>
</compile_context>

<pallas_src>
import functools

import jax
import jax.numpy as jnp
from jax.experimental import pallas as pl
from jax.experimental.pallas import tpu as pltpu

N_EMBD = 16
EPS = 1e-5
_HIGHEST = jax.lax.Precision.HIGHEST  # keep matmuls effectively f32-exact


def _recommender_kernel(
    u_idx_ref, i_idx_ref,        # (1, TB) int32 index tiles
    emb_w1_ref,                  # (32, Nu+Ni)  combined table with fc1 folded in
    b1_ref,                      # (32, 1)
    w2_ref, b2_ref,              # (16, 32), (16, 1)   (BN1 folded in)
    w3_ref, b3_ref,              # (8, 16),  (8, 1)    (BN2 folded in)
    w4_ref, b4_ref,              # (1, 8),   (1, 1)    (BN3 folded in)
    o_ref,                       # (1, TB)
    *, num_users,
):
    tb = u_idx_ref.shape[-1]
    n_tot = emb_w1_ref.shape[-1]

    # Two-hot gather: each lane's column has a 1 at its user row and a 1 at
    # (num_users + item) row, so one MXU matmul does gather + concat + fc1.
    rows = jax.lax.broadcasted_iota(jnp.int32, (n_tot, tb), 0)
    twohot = jnp.logical_or(
        rows == u_idx_ref[...],
        rows == (i_idx_ref[...] + num_users)).astype(jnp.float32)   # (Ntot, TB)

    def layer(h, w_ref, b_ref):
        # (out, in) @ (in, TB) + (out, 1) -- batch stays on lanes.
        return jnp.dot(w_ref[...], h, preferred_element_type=jnp.float32,
                       precision=_HIGHEST) + b_ref[...]

    h = jnp.dot(emb_w1_ref[...], twohot, preferred_element_type=jnp.float32,
                precision=_HIGHEST) + b1_ref[...]                    # fc1
    h = jnp.maximum(h, 0.0)
    h = jnp.maximum(layer(h, w2_ref, b2_ref), 0.0)   # (bn1 folded) fc2 + relu
    h = jnp.maximum(layer(h, w3_ref, b3_ref), 0.0)   # (bn2 folded) fc3 + relu
    h = layer(h, w4_ref, b4_ref)                     # (bn3 folded) fc4
    o_ref[...] = (jax.nn.sigmoid(h) * 5.0).astype(o_ref.dtype)


def _round_up(x, m):
    return (x + m - 1) // m * m


def _fold_params(params):
    """Fold eval-mode BatchNorms into the Linears and fc1 into the tables."""
    def scale_shift(g, be, m, v):
        s = g * jax.lax.rsqrt(v + EPS)
        return s, be - m * s

    s1, t1 = scale_shift(params["g1"], params["be1"], params["m1"], params["v1"])
    s2, t2 = scale_shift(params["g2"], params["be2"], params["m2"], params["v2"])
    s3, t3 = scale_shift(params["g3"], params["be3"], params["m3"], params["v3"])

    w1, b1 = params["w1"], params["b1"]                       # (32, 32), (32,)
    # fc1 folded into the embedding tables (gather + concat + fc1 -> one matmul).
    u1 = jnp.dot(params["user_emb"], w1[:, :N_EMBD].T, precision=_HIGHEST)  # (Nu, 32)
    i1 = jnp.dot(params["item_emb"], w1[:, N_EMBD:].T, precision=_HIGHEST)  # (Ni, 32)
    emb_w1_t = jnp.concatenate([u1, i1], axis=0).T                          # (32, Nu+Ni)

    w2 = params["w2"] * s1[None, :]                            # (16, 32)
    b2 = params["b2"] + jnp.dot(params["w2"], t1, precision=_HIGHEST)
    w3 = params["w3"] * s2[None, :]                            # (8, 16)
    b3 = params["b3"] + jnp.dot(params["w3"], t2, precision=_HIGHEST)
    w4 = params["w4"] * s3[None, :]                            # (1, 8)
    b4 = params["b4"] + jnp.dot(params["w4"], t3, precision=_HIGHEST)
    return (emb_w1_t, b1[:, None], w2, b2[:, None],
            w3, b3[:, None], w4, b4[:, None])


@jax.jit
def recommender_forward(user, item, params):
    B = user.shape[0]
    num_users = params["user_emb"].shape[0]

    # Lane-sized batch tiles (multiple of 128), capped to keep VMEM tiny.
    TB = min(1024, _round_up(max(B, 1), 128))
    B_pad = _round_up(B, TB)
    grid = (B_pad // TB,)

    # Pad indices with 0 (a valid row); padded lanes are dropped afterwards.
    u_idx = jnp.pad(user.astype(jnp.int32)[None, :], ((0, 0), (0, B_pad - B)))
    i_idx = jnp.pad(item.astype(jnp.int32)[None, :], ((0, 0), (0, B_pad - B)))

    emb_w1_t, b1, w2, b2, w3, b3, w4, b4 = _fold_params(params)

    def rep(arr):
        # Small parameter: full-array block, VMEM-resident across all steps.
        return pl.BlockSpec(arr.shape, lambda i: (0, 0))

    idx_spec = pl.BlockSpec((1, TB), lambda i: (0, i))

    out = pl.pallas_call(
        functools.partial(_recommender_kernel, num_users=num_users),
        out_shape=jax.ShapeDtypeStruct((1, B_pad), jnp.float32),
        grid=grid,
        in_specs=[idx_spec, idx_spec,
                  rep(emb_w1_t), rep(b1),
                  rep(w2), rep(b2), rep(w3), rep(b3), rep(w4), rep(b4)],
        out_specs=pl.BlockSpec((1, TB), lambda i: (0, i)),
        compiler_params=pltpu.CompilerParams(
            dimension_semantics=("parallel",)),
    )(u_idx, i_idx, emb_w1_t, b1, w2, b2, w3, b3, w4, b4)

    # (1, B_pad) lane-dense kernel output -> (B, 1) like the PyTorch module.
    return out[0, :B][:, None]


def init_params(key, num_users, num_items, n_embd=N_EMBD):
    ks = iter(jax.random.split(key, 24))

    def lin(fan_in, fan_out):
        # torch.nn.Linear init: U(-1/sqrt(fan_in), 1/sqrt(fan_in)), W is (out, in).
        bound = 1.0 / (fan_in ** 0.5)
        w = jax.random.uniform(next(ks), (fan_out, fan_in), jnp.float32, -bound, bound)
        b = jax.random.uniform(next(ks), (fan_out,), jnp.float32, -bound, bound)
        return w, b

    def bn_params(n):
        g = jax.random.uniform(next(ks), (n,), jnp.float32, 0.5, 1.5)
        be = jax.random.uniform(next(ks), (n,), jnp.float32, -0.5, 0.5)
        m = jax.random.uniform(next(ks), (n,), jnp.float32, -0.5, 0.5)
        v = jax.random.uniform(next(ks), (n,), jnp.float32, 0.5, 1.5)
        return g, be, m, v

    params = {}
    params["user_emb"] = jax.random.normal(next(ks), (num_users, n_embd), jnp.float32)
    params["item_emb"] = jax.random.normal(next(ks), (num_items, n_embd), jnp.float32)

    params["w1"], params["b1"] = lin(n_embd * 2, 32)
    params["w2"], params["b2"] = lin(32, 16)
    params["w3"], params["b3"] = lin(16, 8)
    params["w4"], params["b4"] = lin(8, 1)

    params["g1"], params["be1"], params["m1"], params["v1"] = bn_params(32)
    params["g2"], params["be2"], params["m2"], params["v2"] = bn_params(16)
    params["g3"], params["be3"], params["m3"], params["v3"] = bn_params(8)
    return params


def _reference(user, item, params):
    # Pure-JAX reference (eval-mode BN, identity dropout), f32 matmuls.
    u = jnp.take(params["user_emb"], user, axis=0)
    i = jnp.take(params["item_emb"], item, axis=0)
    x = jnp.concatenate([u, i], axis=-1)

    def lin(h, w, b):
        return jnp.dot(h, w.T, precision=_HIGHEST) + b

    def bn(h, g, be, m, v):
        return (h - m) * jax.lax.rsqrt(v + EPS) * g + be

    h = bn(jnp.maximum(lin(x, params["w1"], params["b1"]), 0.0),
           params["g1"], params["be1"], params["m1"], params["v1"])
    h = bn(jnp.maximum(lin(h, params["w2"], params["b2"]), 0.0),
           params["g2"], params["be2"], params["m2"], params["v2"])
    h = bn(jnp.maximum(lin(h, params["w3"], params["b3"]), 0.0),
           params["g3"], params["be3"], params["m3"], params["v3"])
    h = lin(h, params["w4"], params["b4"])
    return jax.nn.sigmoid(h) * 5.0


if __name__ == "__main__":
    key = jax.random.PRNGKey(0)
    k_params, k_user, k_item = jax.random.split(key, 3)

    num_users, num_items, batch = 100, 50, 8
    params = init_params(k_params, num_users, num_items)

    user = jax.random.randint(k_user, (batch,), 0, num_users, dtype=jnp.int32)
    item = jax.random.randint(k_item, (batch,), 0, num_items, dtype=jnp.int32)

    out = jax.block_until_ready(recommender_forward(user, item, params))
    ref = _reference(user, item, params)

    assert out.shape == (batch, 1)
    assert bool(jnp.all(jnp.isfinite(out)))
    assert bool(jnp.allclose(out, ref, atol=1e-4, rtol=1e-4)), (
        float(jnp.max(jnp.abs(out - ref))))

    print("KERNEL_OK")
</pallas_src>

<mosaic_0001>
module attributes {stable_mosaic.version = 11 : i64} {
  func.func @_recommender_kernel(%arg0: i32, %arg1: memref<1x128xi32, #tpu.memory_space<vmem>>, %arg2: memref<1x128xi32, #tpu.memory_space<vmem>>, %arg3: memref<32x150xf32, #tpu.memory_space<vmem>>, %arg4: memref<32x1xf32, #tpu.memory_space<vmem>>, %arg5: memref<16x32xf32, #tpu.memory_space<vmem>>, %arg6: memref<16x1xf32, #tpu.memory_space<vmem>>, %arg7: memref<8x16xf32, #tpu.memory_space<vmem>>, %arg8: memref<8x1xf32, #tpu.memory_space<vmem>>, %arg9: memref<1x8xf32, #tpu.memory_space<vmem>>, %arg10: memref<1x1xf32, #tpu.memory_space<vmem>>, %arg11: memref<1x128xf32, #tpu.memory_space<vmem>>) attributes {dimension_semantics = [#tpu.dimension_semantics<parallel>], iteration_bounds = array<i64: 1>, scalar_prefetch = 0 : i64, scratch_operands = 0 : i64, tpu.core_type = #tpu.core_type<tc>, window_params = [{transform_indices = @transform_0, window_bounds = array<i64: 1, 128>}, {transform_indices = @transform_1, window_bounds = array<i64: 1, 128>}, {pipeline_mode = #tpu.pipeline_mode<synchronous>, transform_indices = @transform_2, window_bounds = array<i64: 32, 150>}, {pipeline_mode = #tpu.pipeline_mode<synchronous>, transform_indices = @transform_3, window_bounds = array<i64: 32, 1>}, {pipeline_mode = #tpu.pipeline_mode<synchronous>, transform_indices = @transform_4, window_bounds = array<i64: 16, 32>}, {pipeline_mode = #tpu.pipeline_mode<synchronous>, transform_indices = @transform_5, window_bounds = array<i64: 16, 1>}, {pipeline_mode = #tpu.pipeline_mode<synchronous>, transform_indices = @transform_6, window_bounds = array<i64: 8, 16>}, {pipeline_mode = #tpu.pipeline_mode<synchronous>, transform_indices = @transform_7, window_bounds = array<i64: 8, 1>}, {pipeline_mode = #tpu.pipeline_mode<synchronous>, transform_indices = @transform_8, window_bounds = array<i64: 1, 8>}, {pipeline_mode = #tpu.pipeline_mode<synchronous>, transform_indices = @transform_9, window_bounds = array<i64: 1, 1>}, {transform_indices = @transform_10, window_bounds = array<i64: 1, 128>}]} {
    %0 = tpu.iota {dimensions = array<i32: 0>} : vector<150x128xi32>
    %c0 = arith.constant 0 : index
    %c0_0 = arith.constant 0 : index
    %1 = vector.load %arg1[%c0, %c0_0] : memref<1x128xi32, #tpu.memory_space<vmem>>, vector<1x128xi32>
    %2 = vector.broadcast %1 : vector<1x128xi32> to vector<150x128xi32>
    %3 = arith.cmpi eq, %0, %2 : vector<150x128xi32>
    %c0_1 = arith.constant 0 : index
    %c0_2 = arith.constant 0 : index
    %4 = vector.load %arg2[%c0_1, %c0_2] : memref<1x128xi32, #tpu.memory_space<vmem>>, vector<1x128xi32>
    %c100_i32 = arith.constant 100 : i32
    %5 = vector.broadcast %c100_i32 : i32 to vector<1x128xi32>
    %6 = arith.addi %4, %5 : vector<1x128xi32>
    %7 = vector.broadcast %6 : vector<1x128xi32> to vector<150x128xi32>
    %8 = arith.cmpi eq, %0, %7 : vector<150x128xi32>
    %9 = arith.ori %3, %8 : vector<150x128xi1>
    %10 = arith.extui %9 : vector<150x128xi1> to vector<150x128xi32>
    %11 = arith.sitofp %10 : vector<150x128xi32> to vector<150x128xf32>
    %c0_3 = arith.constant 0 : index
    %c0_4 = arith.constant 0 : index
    %12 = vector.load %arg3[%c0_3, %c0_4] : memref<32x150xf32, #tpu.memory_space<vmem>>, vector<32x150xf32>
    %cst = arith.constant dense<0.000000e+00> : vector<32x128xf32>
    %13 = tpu.matmul %12, %11, %cst {dimension_numbers = #tpu.dot_dimension_numbers<[1], [0], [0], [1], [0, 0, 1, 1], [], []>, precision = #tpu.contract_precision<fp32>} : vector<32x150xf32>, vector<150x128xf32>, vector<32x128xf32> -> vector<32x128xf32>
    %c0_5 = arith.constant 0 : index
    %c0_6 = arith.constant 0 : index
    %14 = vector.load %arg4[%c0_5, %c0_6] : memref<32x1xf32, #tpu.memory_space<vmem>>, vector<32x1xf32>
    %15 = vector.broadcast %14 : vector<32x1xf32> to vector<32x128xf32>
    %16 = arith.addf %13, %15 : vector<32x128xf32>
    %cst_7 = arith.constant 0.000000e+00 : f32
    %17 = vector.broadcast %cst_7 : f32 to vector<32x128xf32>
    %18 = arith.maximumf %16, %17 : vector<32x128xf32>
    %c0_8 = arith.constant 0 : index
    %c0_9 = arith.constant 0 : index
    %19 = vector.load %arg5[%c0_8, %c0_9] : memref<16x32xf32, #tpu.memory_space<vmem>>, vector<16x32xf32>
    %cst_10 = arith.constant dense<0.000000e+00> : vector<16x128xf32>
    %20 = tpu.matmul %19, %18, %cst_10 {dimension_numbers = #tpu.dot_dimension_numbers<[1], [0], [0], [1], [0, 0, 1, 1], [], []>, precision = #tpu.contract_precision<fp32>} : vector<16x32xf32>, vector<32x128xf32>, vector<16x128xf32> -> vector<16x128xf32>
    %c0_11 = arith.constant 0 : index
    %c0_12 = arith.constant 0 : index
    %21 = vector.load %arg6[%c0_11, %c0_12] : memref<16x1xf32, #tpu.memory_space<vmem>>, vector<16x1xf32>
    %22 = vector.broadcast %21 : vector<16x1xf32> to vector<16x128xf32>
    %23 = arith.addf %20, %22 : vector<16x128xf32>
    %cst_13 = arith.constant 0.000000e+00 : f32
    %24 = vector.broadcast %cst_13 : f32 to vector<16x128xf32>
    %25 = arith.maximumf %23, %24 : vector<16x128xf32>
    %c0_14 = arith.constant 0 : index
    %c0_15 = arith.constant 0 : index
    %26 = vector.load %arg7[%c0_14, %c0_15] : memref<8x16xf32, #tpu.memory_space<vmem>>, vector<8x16xf32>
    %cst_16 = arith.constant dense<0.000000e+00> : vector<8x128xf32>
    %27 = tpu.matmul %26, %25, %cst_16 {dimension_numbers = #tpu.dot_dimension_numbers<[1], [0], [0], [1], [0, 0, 1, 1], [], []>, precision = #tpu.contract_precision<fp32>} : vector<8x16xf32>, vector<16x128xf32>, vector<8x128xf32> -> vector<8x128xf32>
    %c0_17 = arith.constant 0 : index
    %c0_18 = arith.constant 0 : index
    %28 = vector.load %arg8[%c0_17, %c0_18] : memref<8x1xf32, #tpu.memory_space<vmem>>, vector<8x1xf32>
    %29 = vector.broadcast %28 : vector<8x1xf32> to vector<8x128xf32>
    %30 = arith.addf %27, %29 : vector<8x128xf32>
    %cst_19 = arith.constant 0.000000e+00 : f32
    %31 = vector.broadcast %cst_19 : f32 to vector<8x128xf32>
    %32 = arith.maximumf %30, %31 : vector<8x128xf32>
    %c0_20 = arith.constant 0 : index
    %c0_21 = arith.constant 0 : index
    %33 = vector.load %arg9[%c0_20, %c0_21] : memref<1x8xf32, #tpu.memory_space<vmem>>, vector<1x8xf32>
    %cst_22 = arith.constant dense<0.000000e+00> : vector<1x128xf32>
    %34 = tpu.matmul %33, %32, %cst_22 {dimension_numbers = #tpu.dot_dimension_numbers<[1], [0], [0], [1], [0, 0, 1, 1], [], []>, precision = #tpu.contract_precision<fp32>} : vector<1x8xf32>, vector<8x128xf32>, vector<1x128xf32> -> vector<1x128xf32>
    %c0_23 = arith.constant 0 : index
    %c0_24 = arith.constant 0 : index
    %35 = vector.load %arg10[%c0_23, %c0_24] : memref<1x1xf32, #tpu.memory_space<vmem>>, vector<1x1xf32>
    %36 = vector.broadcast %35 : vector<1x1xf32> to vector<1x128xf32>
    %37 = arith.addf %34, %36 : vector<1x128xf32>
    %38 = arith.negf %37 : vector<1x128xf32>
    %39 = math.exp %38 : vector<1x128xf32>
    %cst_25 = arith.constant 1.000000e+00 : f32
    %40 = vector.broadcast %cst_25 : f32 to vector<1x128xf32>
    %41 = arith.addf %40, %39 : vector<1x128xf32>
    %42 = arith.divf %40, %41 : vector<1x128xf32>
    %cst_26 = arith.constant 5.000000e+00 : f32
    %43 = vector.broadcast %cst_26 : f32 to vector<1x128xf32>
    %44 = arith.mulf %42, %43 : vector<1x128xf32>
    %c0_27 = arith.constant 0 : index
    %c0_28 = arith.constant 0 : index
    %45 = vector.load %arg11[%c0_27, %c0_28] : memref<1x128xf32, #tpu.memory_space<vmem>>, vector<1x128xf32>
    tpu.vector_store %arg11[%c0_27, %c0_28], %44 {strides = array<i32>} : memref<1x128xf32, #tpu.memory_space<vmem>>, vector<1x128xf32>,
    return
  }
  func.func @transform_0(%arg0: i32) -> (i32, i32) {
    %c0_i32 = arith.constant 0 : i32
    %c0_i32_0 = arith.constant 0 : i32
    return %c0_i32, %arg0 : i32, i32
  }
  func.func @transform_1(%arg0: i32) -> (i32, i32) {
    %c0_i32 = arith.constant 0 : i32
    %c0_i32_0 = arith.constant 0 : i32
    return %c0_i32, %arg0 : i32, i32
  }
  func.func @transform_2(%arg0: i32) -> (i32, i32) {
    %c0_i32 = arith.constant 0 : i32
    %c0_i32_0 = arith.constant 0 : i32
    %c0_i32_1 = arith.constant 0 : i32
    return %c0_i32, %c0_i32_0 : i32, i32
  }
  func.func @transform_3(%arg0: i32) -> (i32, i32) {
    %c0_i32 = arith.constant 0 : i32
    %c0_i32_0 = arith.constant 0 : i32
    %c0_i32_1 = arith.constant 0 : i32
    return %c0_i32, %c0_i32_0 : i32, i32
  }
  func.func @transform_4(%arg0: i32) -> (i32, i32) {
    %c0_i32 = arith.constant 0 : i32
    %c0_i32_0 = arith.constant 0 : i32
    %c0_i32_1 = arith.constant 0 : i32
    return %c0_i32, %c0_i32_0 : i32, i32
  }
  func.func @transform_5(%arg0: i32) -> (i32, i32) {
    %c0_i32 = arith.constant 0 : i32
    %c0_i32_0 = arith.constant 0 : i32
    %c0_i32_1 = arith.constant 0 : i32
    return %c0_i32, %c0_i32_0 : i32, i32
  }
  func.func @transform_6(%arg0: i32) -> (i32, i32) {
    %c0_i32 = arith.constant 0 : i32
    %c0_i32_0 = arith.constant 0 : i32
    %c0_i32_1 = arith.constant 0 : i32
    return %c0_i32, %c0_i32_0 : i32, i32
  }
  func.func @transform_7(%arg0: i32) -> (i32, i32) {
    %c0_i32 = arith.constant 0 : i32
    %c0_i32_0 = arith.constant 0 : i32
    %c0_i32_1 = arith.constant 0 : i32
    return %c0_i32, %c0_i32_0 : i32, i32
  }
  func.func @transform_8(%arg0: i32) -> (i32, i32) {
    %c0_i32 = arith.constant 0 : i32
    %c0_i32_0 = arith.constant 0 : i32
    %c0_i32_1 = arith.constant 0 : i32
    return %c0_i32, %c0_i32_0 : i32, i32
  }
  func.func @transform_9(%arg0: i32) -> (i32, i32) {
    %c0_i32 = arith.constant 0 : i32
    %c0_i32_0 = arith.constant 0 : i32
    %c0_i32_1 = arith.constant 0 : i32
    return %c0_i32, %c0_i32_0 : i32, i32
  }
  func.func @transform_10(%arg0: i32) -> (i32, i32) {
    %c0_i32 = arith.constant 0 : i32
    %c0_i32_0 = arith.constant 0 : i32
    return %c0_i32, %arg0 : i32, i32
  }
}

</mosaic_0001>

<llo_original>
// kernel: recommender_forward.1
$region0: #{recommender_forward.1}
  #allocation0 [shape = 'u32[]', space=smem, size = 0x4, offset = 0x4, fixed_abs, tag = 'smem constant byte address 0x4 - core index']
  #allocation1 [shape = 'u32[72,128]{1,0:T(1,128)}', space=vmem, size = 0x9000, scoped, tag = 'internal scratch']
  #allocation2 [shape = 'f32[1,1]{1,0:T(1,128)S(1)}', space=vmem, size = 0x200, scoped, tag = 'scoped memory for recommender_forward.1']
  %s0 = inlined_call_operand.vmem [shape: s32[1,128], index: 0, kind: input, shape index: {}]
  %s1 = inlined_call_operand.vmem [shape: s32[1,128], index: 1, kind: input, shape index: {}]
  %s2 = inlined_call_operand.vmem [shape: f32[32,150], index: 2, kind: input, shape index: {}]
  %s3 = inlined_call_operand.vmem [shape: f32[32,1], index: 3, kind: input, shape index: {}]
  %s4 = inlined_call_operand.vmem [shape: f32[16,32], index: 4, kind: input, shape index: {}]
  %s5 = inlined_call_operand.vmem [shape: f32[16,1], index: 5, kind: input, shape index: {}]
  %s6 = inlined_call_operand.vmem [shape: f32[8,16], index: 6, kind: input, shape index: {}]
  %s7 = inlined_call_operand.vmem [shape: f32[8,1], index: 7, kind: input, shape index: {}]
  %s8 = inlined_call_operand.vmem [shape: f32[1,8], index: 8, kind: input, shape index: {}]
  %s9 = inlined_call_operand.<no memory space> [shape: f32[1,1], index: 9, kind: input, shape index: {}]
  %s10 = inlined_call_operand.vmem [shape: f32[1,128], index: 10, kind: output, shape index: {}]
  %s11 = sld [smem:[#allocation0]]
  $region50: #{recommender_forward.1} parent=0
    _
  %s13 = ssub.s32 1, %s11
  %s14 = scalar_select 0, %s13, %s11
  %v15 = vstv %s9
  %16 = vst [vmem:[#allocation2] sm:$0x1] %v15
  // Predicated region
  $region2: #{recommender_forward.1} parent=0 // pred_check
    _
  $region3: #{recommender_forward.1} parent=0 // pred_check_branch
    %18 = sbr.rel (0) target = $region5
  $region4: #{recommender_forward.1} parent=0 // pred_region
    _
  $region5: #{recommender_forward.1} parent=0 // pred_fallthru
    _
  // Predicated region
  $region6: #{recommender_forward.1} parent=0 // pred_check
    _
  $region7: #{recommender_forward.1} parent=0 // pred_check_branch
    %20 = sbr.rel (0) target = $region9
  $region8: #{recommender_forward.1} parent=0 // pred_region
    _
  $region9: #{recommender_forward.1} parent=0 // pred_fallthru
    _
  // Predicated region
  $region10: #{recommender_forward.1} parent=0 // pred_check
    _
  $region11: #{recommender_forward.1} parent=0 // pred_check_branch
    %22 = sbr.rel (0) target = $region13
  $region12: #{recommender_forward.1} parent=0 // pred_region
    _
  $region13: #{recommender_forward.1} parent=0 // pred_fallthru
    _
  // Predicated region
  $region14: #{recommender_forward.1} parent=0 // pred_check
    _
  $region15: #{recommender_forward.1} parent=0 // pred_check_branch
    %24 = sbr.rel (0) target = $region17
  $region16: #{recommender_forward.1} parent=0 // pred_region
    _
  $region17: #{recommender_forward.1} parent=0 // pred_fallthru
    _
  // Predicated region
  $region18: #{recommender_forward.1} parent=0 // pred_check
    _
  $region19: #{recommender_forward.1} parent=0 // pred_check_branch
    %26 = sbr.rel (0) target = $region21
  $region20: #{recommender_forward.1} parent=0 // pred_region
    _
  $region21: #{recommender_forward.1} parent=0 // pred_fallthru
    _
  // Predicated region
  $region22: #{recommender_forward.1} parent=0 // pred_check
    _
  $region23: #{recommender_forward.1} parent=0 // pred_check_branch
    %28 = sbr.rel (0) target = $region25
  $region24: #{recommender_forward.1} parent=0 // pred_region
    _
  $region25: #{recommender_forward.1} parent=0 // pred_fallthru
    _
  // Predicated region
  $region26: #{recommender_forward.1} parent=0 // pred_check
    _
  $region27: #{recommender_forward.1} parent=0 // pred_check_branch
    %30 = sbr.rel (0) target = $region29
  $region28: #{recommender_forward.1} parent=0 // pred_region
    _
  $region29: #{recommender_forward.1} parent=0 // pred_fallthru
    _
  // Predicated region
  $region30: #{recommender_forward.1} parent=0 // pred_check
    _
  $region31: #{recommender_forward.1} parent=0 // pred_check_branch
    %32 = sbr.rel (0) target = $region33
  $region32: #{recommender_forward.1} parent=0 // pred_region
    _
  $region33: #{recommender_forward.1} parent=0 // pred_fallthru
    _
  // Predicated region
  $region34: #{recommender_forward.1} parent=0 // pred_check
    _
  $region35: #{recommender_forward.1} parent=0 // pred_check_branch
    %34 = sbr.rel (0) target = $region37
  $region36: #{recommender_forward.1} parent=0 // pred_region
    _
  $region37: #{recommender_forward.1} parent=0 // pred_fallthru
    _
  // Predicated region
  $region38: #{recommender_forward.1} parent=0 // pred_check
    _
  $region39: #{recommender_forward.1} parent=0 // pred_check_branch
    %36 = sbr.rel (0) target = $region41
  $region40: #{recommender_forward.1} parent=0 // pred_region
    _
  $region41: #{recommender_forward.1} parent=0 // pred_fallthru
    _
  %v37 = vlaneseq
  %v38 = vshrl.u32 %v37, 7
  %v39 = vadd.s32 %v38, 8
  %v40 = vadd.s32 %v38, 16
  %v41 = vadd.s32 %v38, 24
  %v42 = vadd.s32 %v38, 32
  %v43 = vadd.s32 %v38, 40
  %v44 = vadd.s32 %v38, 48
  %v45 = vadd.s32 %v38, 56
  %v46 = vadd.s32 %v38, 64
  %v47 = vadd.s32 %v38, 72
  %v48 = vadd.s32 %v38, 80
  %v49 = vadd.s32 %v38, 88
  %v50 = vadd.s32 %v38, 96
  %v51 = vadd.s32 %v38, 104
  %v52 = vadd.s32 %v38, 112
  %v53 = vadd.s32 %v38, 120
  %v54 = vadd.s32 %v38, 128
  %v55 = vadd.s32 %v38, 136
  %v56 = vadd.s32 %v38, 144
  %v57 = vld [vmem:[%s0] sm:$0x1]
  %v58 = vperm.slane %v57, 0
  %vm59 = vcmp.eq.s32.totalorder %v38, %v58
  %vm60 = vcmp.eq.s32.totalorder %v39, %v58
  %vm61 = vcmp.eq.s32.totalorder %v40, %v58
  %vm62 = vcmp.eq.s32.totalorder %v41, %v58
  %vm63 = vcmp.eq.s32.totalorder %v42, %v58
  %vm64 = vcmp.eq.s32.totalorder %v43, %v58
  %vm65 = vcmp.eq.s32.totalorder %v44, %v58
  %vm66 = vcmp.eq.s32.totalorder %v45, %v58
  %vm67 = vcmp.eq.s32.totalorder %v46, %v58
  %vm68 = vcmp.eq.s32.totalorder %v47, %v58
  %vm69 = vcmp.eq.s32.totalorder %v48, %v58
  %vm70 = vcmp.eq.s32.totalorder %v49, %v58
  %vm71 = vcmp.eq.s32.totalorder %v50, %v58
  %vm72 = vcmp.eq.s32.totalorder %v51, %v58
  %vm73 = vcmp.eq.s32.totalorder %v52, %v58
  %vm74 = vcmp.eq.s32.totalorder %v53, %v58
  %vm75 = vcmp.eq.s32.totalorder %v54, %v58
  %vm76 = vcmp.eq.s32.totalorder %v55, %v58
  %vm77 = vcmp.eq.s32.totalorder %v56, %v58
  %v78 = vld [vmem:[%s1] sm:$0x1]
  %v79 = vadd.s32 %v78, 100
  %v80 = vperm.slane %v79, 0
  %vm81 = vcmp.eq.s32.totalorder %v38, %v80
  %vm82 = vcmp.eq.s32.totalorder %v39, %v80
  %vm83 = vcmp.eq.s32.totalorder %v40, %v80
  %vm84 = vcmp.eq.s32.totalorder %v41, %v80
  %vm85 = vcmp.eq.s32.totalorder %v42, %v80
  %vm86 = vcmp.eq.s32.totalorder %v43, %v80
  %vm87 = vcmp.eq.s32.totalorder %v44, %v80
  %vm88 = vcmp.eq.s32.totalorder %v45, %v80
  %vm89 = vcmp.eq.s32.totalorder %v46, %v80
  %vm90 = vcmp.eq.s32.totalorder %v47, %v80
  %vm91 = vcmp.eq.s32.totalorder %v48, %v80
  %vm92 = vcmp.eq.s32.totalorder %v49, %v80
  %vm93 = vcmp.eq.s32.totalorder %v50, %v80
  %vm94 = vcmp.eq.s32.totalorder %v51, %v80
  %vm95 = vcmp.eq.s32.totalorder %v52, %v80
  %vm96 = vcmp.eq.s32.totalorder %v53, %v80
  %vm97 = vcmp.eq.s32.totalorder %v54, %v80
  %vm98 = vcmp.eq.s32.totalorder %v55, %v80
  %vm99 = vcmp.eq.s32.totalorder %v56, %v80
  %vm100 = vmor %vm59, %vm81
  %vm101 = vmor %vm60, %vm82
  %vm102 = vmor %vm61, %vm83
  %vm103 = vmor %vm62, %vm84
  %vm104 = vmor %vm63, %vm85
  %vm105 = vmor %vm64, %vm86
  %vm106 = vmor %vm65, %vm87
  %vm107 = vmor %vm66, %vm88
  %vm108 = vmor %vm67, %vm89
  %vm109 = vmor %vm68, %vm90
  %vm110 = vmor %vm69, %vm91
  %vm111 = vmor %vm70, %vm92
  %vm112 = vmor %vm71, %vm93
  %vm113 = vmor %vm72, %vm94
  %vm114 = vmor %vm73, %vm95
  %vm115 = vmor %vm74, %vm96
  %vm116 = vmor %vm75, %vm97
  %vm117 = vmor %vm76, %vm98
  %vm118 = vmor %vm77, %vm99
  %v119 = vsel %vm100, 1, 0
  %v120 = vsel %vm101, 1, 0
  %v121 = vsel %vm102, 1, 0
  %v122 = vsel %vm103, 1, 0
  %v123 = vsel %vm104, 1, 0
  %v124 = vsel %vm105, 1, 0
  %v125 = vsel %vm106, 1, 0
  %v126 = vsel %vm107, 1, 0
  %v127 = vsel %vm108, 1, 0
  %v128 = vsel %vm109, 1, 0
  %v129 = vsel %vm110, 1, 0
  %v130 = vsel %vm111, 1, 0
  %v131 = vsel %vm112, 1, 0
  %v132 = vsel %vm113, 1, 0
  %v133 = vsel %vm114, 1, 0
  %v134 = vsel %vm115, 1, 0
  %v135 = vsel %vm116, 1, 0
  %v136 = vsel %vm117, 1, 0
  %v137 = vsel %vm118, 1, 0
  %v138 = vcvt.s32.f32 %v119
  %v139 = vcvt.s32.f32 %v120
  %v140 = vcvt.s32.f32 %v121
  %v141 = vcvt.s32.f32 %v122
  %v142 = vcvt.s32.f32 %v123
  %v143 = vcvt.s32.f32 %v124
  %v144 = vcvt.s32.f32 %v125
  %v145 = vcvt.s32.f32 %v126
  %v146 = vcvt.s32.f32 %v127
  %v147 = vcvt.s32.f32 %v128
  %v148 = vcvt.s32.f32 %v129
  %v149 = vcvt.s32.f32 %v130
  %v150 = vcvt.s32.f32 %v131
  %v151 = vcvt.s32.f32 %v132
  %v152 = vcvt.s32.f32 %v133
  %v153 = vcvt.s32.f32 %v134
  %v154 = vcvt.s32.f32 %v135
  %v155 = vcvt.s32.f32 %v136
  %v156 = vcvt.s32.f32 %v137
  %v157 = vld [vmem:[%s2] sm:$0xff]
  %v158 = vld [vmem:[%s2 + $0x8] sm:$0xff]
  %v159 = vld [vmem:[%s2 + $0x10] sm:$0xff]
  %v160 = vld [vmem:[%s2 + $0x18] sm:$0xff]
  %v161 = vld [vmem:[%s2 + $0x20] sm:$0xff]
  %v162 = vld [vmem:[%s2 + $0x28] sm:$0xff]
  %v163 = vld [vmem:[%s2 + $0x30] sm:$0xff]
  %v164 = vld [vmem:[%s2 + $0x38] sm:$0xff]
  %v165 = vld [vmem:[%s3] sm:$0xff]
  %v166 = vld [vmem:[%s3 + $0x8] sm:$0xff]
  %v167 = vld [vmem:[%s3 + $0x10] sm:$0xff]
  %v168 = vld [vmem:[%s3 + $0x18] sm:$0xff]
  %170 = vset.pattern.permute.xlu0 0
  %171 = vperm.xlu0 %170, %v165
  %v172 = vpop.permute.xlu0 %171
  %175 = vset.pattern.permute.xlu0 0
  %176 = vperm.xlu0 %175, %v166
  %v177 = vpop.permute.xlu0 %176
  %180 = vset.pattern.permute.xlu0 0
  %181 = vperm.xlu0 %180, %v167
  %v182 = vpop.permute.xlu0 %181
  %185 = vset.pattern.permute.xlu0 0
  %186 = vperm.xlu0 %185, %v168
  %v187 = vpop.permute.xlu0 %186
  %vm189 = vcmask 179200
  %v191 = vsel %vm189, %v158, 0
  %v194 = vsel %vm189, %v160, 0
  %v197 = vsel %vm189, %v162, 0
  %v200 = vsel %vm189, %v164, 0
  %vm202 = vcmask 1045504
  %v204 = vsel %vm202, %v156, 0
  %v206 = vand.u32 %v153, 4294901760
  %207 = vmatpush.msra.mxu0 %v206
  %v208 = vand.u32 %v152, 4294901760
  %209 = vmatpush.msra.mxu0 %v208
  %v210 = vand.u32 %v151, 4294901760
  %211 = vmatpush.msra.mxu0 %v210
  %v212 = vand.u32 %v150, 4294901760
  %213 = vmatpush.msra.mxu0 %v212
  %v214 = vand.u32 %v149, 4294901760
  %215 = vmatpush.msra.mxu0 %v214
  %v216 = vand.u32 %v148, 4294901760
  %217 = vmatpush.msra.mxu0 %v216
  %v218 = vand.u32 %v147, 4294901760
  %219 = vmatpush.msra.mxu0 %v218
  %v220 = vand.u32 %v146, 4294901760
  %221 = vmatpush.msra.mxu0 %v220
  %v222 = vand.u32 %v145, 4294901760
  %223 = vmatpush.msra.mxu0 %v222
  %v224 = vand.u32 %v144, 4294901760
  %225 = vmatpush.msra.mxu0 %v224
  %v226 = vand.u32 %v143, 4294901760
  %227 = vmatpush.msra.mxu0 %v226
  %v228 = vand.u32 %v142, 4294901760
  %229 = vmatpush.msra.mxu0 %v228
  %v230 = vand.u32 %v141, 4294901760
  %231 = vmatpush.msra.mxu0 %v230
  %v232 = vand.u32 %v140, 4294901760
  %233 = vmatpush.msra.mxu0 %v232
  %v234 = vand.u32 %v139, 4294901760
  %235 = vmatpush.msra.mxu0 %v234
  %v236 = vand.u32 %v138, 4294901760
  %237 = vmatpush.msra.mxu0 %v236
  %v238 = vand.u32 %v157, 4294901760
  %v239 = vsub.f32 %v157, %v238
  %v240 = vand.u32 %v239, 4294901760
  %v241 = vsub.f32 %v239, %v240
  %v242 = vand.u32 %v241, 4294901760
  %243 = vmatmul.f32.gmra.mxu0 %v242
  %v244 = vpop.f32.mrf.mxu0
  %v245 = vadd.f32 %v172, %v244
  %v246 = vand.u32 %v159, 4294901760
  %v247 = vsub.f32 %v159, %v246
  %v248 = vand.u32 %v247, 4294901760
  %v249 = vsub.f32 %v247, %v248
  %v250 = vand.u32 %v249, 4294901760
  %251 = vmatmul.f32.gmra.mxu0 %v250
  %v252 = vpop.f32.mrf.mxu0
  %v253 = vadd.f32 %v177, %v252
  %v254 = vand.u32 %v161, 4294901760
  %v255 = vsub.f32 %v161, %v254
  %v256 = vand.u32 %v255, 4294901760
  %v257 = vsub.f32 %v255, %v256
  %v258 = vand.u32 %v257, 4294901760
  %259 = vmatmul.f32.gmra.mxu0 %v258
  %v260 = vpop.f32.mrf.mxu0
  %v261 = vadd.f32 %v182, %v260
  %v262 = vand.u32 %v163, 4294901760
  %v263 = vsub.f32 %v163, %v262
  %v264 = vand.u32 %v263, 4294901760
  %v265 = vsub.f32 %v263, %v264
  %v266 = vand.u32 %v265, 4294901760
  %267 = vmatmul.f32.gmra.mxu0 %v266
  %v268 = vpop.f32.mrf.mxu0
  %v269 = vadd.f32 %v187, %v268
  %270 = vdwg.mxu0
  %v271 = vand.u32 %v153, 4294901760
  %v272 = vsub.f32 %v153, %v271
  %v273 = vand.u32 %v272, 4294901760
  %v274 = vsub.f32 %v272, %v273
  %v275 = vand.u32 %v274, 4294901760
  %276 = vmatpush.msra.mxu0 %v275
  %v277 = vand.u32 %v152, 4294901760
  %v278 = vsub.f32 %v152, %v277
  %v279 = vand.u32 %v278, 4294901760
  %v280 = vsub.f32 %v278, %v279
  %v281 = vand.u32 %v280, 4294901760
  %282 = vmatpush.msra.mxu0 %v281
  %v283 = vand.u32 %v151, 4294901760
  %v284 = vsub.f32 %v151, %v283
  %v285 = vand.u32 %v284, 4294901760
  %v286 = vsub.f32 %v284, %v285
  %v287 = vand.u32 %v286, 4294901760
  %288 = vmatpush.msra.mxu0 %v287
  %v289 = vand.u32 %v150, 4294901760
  %v290 = vsub.f32 %v150, %v289
  %v291 = vand.u32 %v290, 4294901760
  %v292 = vsub.f32 %v290, %v291
  %v293 = vand.u32 %v292, 4294901760
  %294 = vmatpush.msra.mxu0 %v293
  %v295 = vand.u32 %v149, 4294901760
  %v296 = vsub.f32 %v149, %v295
  %v297 = vand.u32 %v296, 4294901760
  %v298 = vsub.f32 %v296, %v297
  %v299 = vand.u32 %v298, 4294901760
  %300 = vmatpush.msra.mxu0 %v299
  %v301 = vand.u32 %v148, 4294901760
  %v302 = vsub.f32 %v148, %v301
  %v303 = vand.u32 %v302, 4294901760
  %v304 = vsub.f32 %v302, %v303
  %v305 = vand.u32 %v304, 4294901760
  %306 = vmatpush.msra.mxu0 %v305
  %v307 = vand.u32 %v147, 4294901760
  %v308 = vsub.f32 %v147, %v307
  %v309 = vand.u32 %v308, 4294901760
  %v310 = vsub.f32 %v308, %v309
  %v311 = vand.u32 %v310, 4294901760
  %312 = vmatpush.msra.mxu0 %v311
  %v313 = vand.u32 %v146, 4294901760
  %v314 = vsub.f32 %v146, %v313
  %v315 = vand.u32 %v314, 4294901760
  %v316 = vsub.f32 %v314, %v315
  %v317 = vand.u32 %v316, 4294901760
  %318 = vmatpush.msra.mxu0 %v317
  %v319 = vand.u32 %v145, 4294901760
  %v320 = vsub.f32 %v145, %v319
  %v321 = vand.u32 %v320, 4294901760
  %v322 = vsub.f32 %v320, %v321
  %v323 = vand.u32 %v322, 4294901760
  %324 = vmatpush.msra.mxu0 %v323
  %v325 = vand.u32 %v144, 4294901760
  %v326 = vsub.f32 %v144, %v325
  %v327 = vand.u32 %v326, 4294901760
  %v328 = vsub.f32 %v326, %v327
  %v329 = vand.u32 %v328, 4294901760
  %330 = vmatpush.msra.mxu0 %v329
  %v331 = vand.u32 %v143, 4294901760
  %v332 = vsub.f32 %v143, %v331
  %v333 = vand.u32 %v332, 4294901760
  %v334 = vsub.f32 %v332, %v333
  %v335 = vand.u32 %v334, 4294901760
  %336 = vmatpush.msra.mxu0 %v335
  %v337 = vand.u32 %v142, 4294901760
  %v338 = vsub.f32 %v142, %v337
  %v339 = vand.u32 %v338, 4294901760
  %v340 = vsub.f32 %v338, %v339
  %v341 = vand.u32 %v340, 4294901760
  %342 = vmatpush.msra.mxu0 %v341
  %v343 = vand.u32 %v141, 4294901760
  %v344 = vsub.f32 %v141, %v343
  %v345 = vand.u32 %v344, 4294901760
  %v346 = vsub.f32 %v344, %v345
  %v347 = vand.u32 %v346, 4294901760
  %348 = vmatpush.msra.mxu0 %v347
  %v349 = vand.u32 %v140, 4294901760
  %v350 = vsub.f32 %v140, %v349
  %v351 = vand.u32 %v350, 4294901760
  %v352 = vsub.f32 %v350, %v351
  %v353 = vand.u32 %v352, 4294901760
  %354 = vmatpush.msra.mxu0 %v353
  %v355 = vand.u32 %v139, 4294901760
  %v356 = vsub.f32 %v139, %v355
  %v357 = vand.u32 %v356, 4294901760
  %v358 = vsub.f32 %v356, %v357
  %v359 = vand.u32 %v358, 4294901760
  %360 = vmatpush.msra.mxu0 %v359
  %v361 = vand.u32 %v138, 4294901760
  %v362 = vsub.f32 %v138, %v361
  %v363 = vand.u32 %v362, 4294901760
  %v364 = vsub.f32 %v362, %v363
  %v365 = vand.u32 %v364, 4294901760
  %366 = vmatpush.msra.mxu0 %v365
  %v367 = vand.u32 %v157, 4294901760
  %368 = vmatmul.f32.gmra.mxu0 %v367
  %v369 = vpop.f32.mrf.mxu0
  %v370 = vadd.f32 %v245, %v369
  %v371 = vand.u32 %v159, 4294901760
  %372 = vmatmul.f32.gmra.mxu0 %v371
  %v373 = vpop.f32.mrf.mxu0
  %v374 = vadd.f32 %v253, %v373
  %v375 = vand.u32 %v161, 4294901760
  %376 = vmatmul.f32.gmra.mxu0 %v375
  %v377 = vpop.f32.mrf.mxu0
  %v378 = vadd.f32 %v261, %v377
  %v379 = vand.u32 %v163, 4294901760
  %380 = vmatmul.f32.gmra.mxu0 %v379
  %v381 = vpop.f32.mrf.mxu0
  %v382 = vadd.f32 %v269, %v381
  %383 = vdwg.mxu0
  %v384 = vand.u32 %v153, 4294901760
  %v385 = vsub.f32 %v153, %v384
  %386 = vmatpush.msra.mxu0 %v385
  %v387 = vand.u32 %v152, 4294901760
  %v388 = vsub.f32 %v152, %v387
  %389 = vmatpush.msra.mxu0 %v388
  %v390 = vand.u32 %v151, 4294901760
  %v391 = vsub.f32 %v151, %v390
  %392 = vmatpush.msra.mxu0 %v391
  %v393 = vand.u32 %v150, 4294901760
  %v394 = vsub.f32 %v150, %v393
  %395 = vmatpush.msra.mxu0 %v394
  %v396 = vand.u32 %v149, 4294901760
  %v397 = vsub.f32 %v149, %v396
  %398 = vmatpush.msra.mxu0 %v397
  %v399 = vand.u32 %v148, 4294901760
  %v400 = vsub.f32 %v148, %v399
  %401 = vmatpush.msra.mxu0 %v400
  %v402 = vand.u32 %v147, 4294901760
  %v403 = vsub.f32 %v147, %v402
  %404 = vmatpush.msra.mxu0 %v403
  %v405 = vand.u32 %v146, 4294901760
  %v406 = vsub.f32 %v146, %v405
  %407 = vmatpush.msra.mxu0 %v406
  %v408 = vand.u32 %v145, 4294901760
  %v409 = vsub.f32 %v145, %v408
  %410 = vmatpush.msra.mxu0 %v409
  %v411 = vand.u32 %v144, 4294901760
  %v412 = vsub.f32 %v144, %v411
  %413 = vmatpush.msra.mxu0 %v412
  %v414 = vand.u32 %v143, 4294901760
  %v415 = vsub.f32 %v143, %v414
  %416 = vmatpush.msra.mxu0 %v415
  %v417 = vand.u32 %v142, 4294901760
  %v418 = vsub.f32 %v142, %v417
  %419 = vmatpush.msra.mxu0 %v418
  %v420 = vand.u32 %v141, 4294901760
  %v421 = vsub.f32 %v141, %v420
  %422 = vmatpush.msra.mxu0 %v421
  %v423 = vand.u32 %v140, 4294901760
  %v424 = vsub.f32 %v140, %v423
  %425 = vmatpush.msra.mxu0 %v424
  %v426 = vand.u32 %v139, 4294901760
  %v427 = vsub.f32 %v139, %v426
  %428 = vmatpush.msra.mxu0 %v427
  %v429 = vand.u32 %v138, 4294901760
  %v430 = vsub.f32 %v138, %v429
  %431 = vmatpush.msra.mxu0 %v430
  %v432 = vand.u32 %v157, 4294901760
  %v433 = vsub.f32 %v157, %v432
  %434 = vmatmul.f32.gmra.mxu0 %v433
  %v435 = vpop.f32.mrf.mxu0
  %v436 = vadd.f32 %v370, %v435
  %v437 = vand.u32 %v159, 4294901760
  %v438 = vsub.f32 %v159, %v437
  %439 = vmatmul.f32.gmra.mxu0 %v438
  %v440 = vpop.f32.mrf.mxu0
  %v441 = vadd.f32 %v374, %v440
  %v442 = vand.u32 %v161, 4294901760
  %v443 = vsub.f32 %v161, %v442
  %444 = vmatmul.f32.gmra.mxu0 %v443
  %v445 = vpop.f32.mrf.mxu0
  %v446 = vadd.f32 %v378, %v445
  %v447 = vand.u32 %v163, 4294901760
  %v448 = vsub.f32 %v163, %v447
  %449 = vmatmul.f32.gmra.mxu0 %v448
  %v450 = vpop.f32.mrf.mxu0
  %v451 = vadd.f32 %v382, %v450
  %452 = vdwg.mxu0
  %v453 = vand.u32 %v153, 4294901760
  %454 = vmatpush.msra.mxu0 %v453
  %v455 = vand.u32 %v152, 4294901760
  %456 = vmatpush.msra.mxu0 %v455
  %v457 = vand.u32 %v151, 4294901760
  %458 = vmatpush.msra.mxu0 %v457
  %v459 = vand.u32 %v150, 4294901760
  %460 = vmatpush.msra.mxu0 %v459
  %v461 = vand.u32 %v149, 4294901760
  %462 = vmatpush.msra.mxu0 %v461
  %v463 = vand.u32 %v148, 4294901760
  %464 = vmatpush.msra.mxu0 %v463
  %v465 = vand.u32 %v147, 4294901760
  %466 = vmatpush.msra.mxu0 %v465
  %v467 = vand.u32 %v146, 4294901760
  %468 = vmatpush.msra.mxu0 %v467
  %v469 = vand.u32 %v145, 4294901760
  %470 = vmatpush.msra.mxu0 %v469
  %v471 = vand.u32 %v144, 4294901760
  %472 = vmatpush.msra.mxu0 %v471
  %v473 = vand.u32 %v143, 4294901760
  %474 = vmatpush.msra.mxu0 %v473
  %v475 = vand.u32 %v142, 4294901760
  %476 = vmatpush.msra.mxu0 %v475
  %v477 = vand.u32 %v141, 4294901760
  %478 = vmatpush.msra.mxu0 %v477
  %v479 = vand.u32 %v140, 4294901760
  %480 = vmatpush.msra.mxu0 %v479
  %v481 = vand.u32 %v139, 4294901760
  %482 = vmatpush.msra.mxu0 %v481
  %v483 = vand.u32 %v138, 4294901760
  %484 = vmatpush.msra.mxu0 %v483
  %v485 = vand.u32 %v157, 4294901760
  %v486 = vsub.f32 %v157, %v485
  %v487 = vand.u32 %v486, 4294901760
  %488 = vmatmul.f32.gmra.mxu0 %v487
  %v489 = vpop.f32.mrf.mxu0
  %v490 = vadd.f32 %v436, %v489
  %v491 = vand.u32 %v159, 4294901760
  %v492 = vsub.f32 %v159, %v491
  %v493 = vand.u32 %v492, 4294901760
  %494 = vmatmul.f32.gmra.mxu0 %v493
  %v495 = vpop.f32.mrf.mxu0
  %v496 = vadd.f32 %v441, %v495
  %v497 = vand.u32 %v161, 4294901760
  %v498 = vsub.f32 %v161, %v497
  %v499 = vand.u32 %v498, 4294901760
  %500 = vmatmul.f32.gmra.mxu0 %v499
  %v501 = vpop.f32.mrf.mxu0
  %v502 = vadd.f32 %v446, %v501
  %v503 = vand.u32 %v163, 4294901760
  %v504 = vsub.f32 %v163, %v503
  %v505 = vand.u32 %v504, 4294901760
  %506 = vmatmul.f32.gmra.mxu0 %v505
  %v507 = vpop.f32.mrf.mxu0
  %v508 = vadd.f32 %v451, %v507
  %509 = vdwg.mxu0
  %v510 = vand.u32 %v153, 4294901760
  %v511 = vsub.f32 %v153, %v510
  %v512 = vand.u32 %v511, 4294901760
  %513 = vmatpush.msra.mxu0 %v512
  %v514 = vand.u32 %v152, 4294901760
  %v515 = vsub.f32 %v152, %v514
  %v516 = vand.u32 %v515, 4294901760
  %517 = vmatpush.msra.mxu0 %v516
  %v518 = vand.u32 %v151, 4294901760
  %v519 = vsub.f32 %v151, %v518
  %v520 = vand.u32 %v519, 4294901760
  %521 = vmatpush.msra.mxu0 %v520
  %v522 = vand.u32 %v150, 4294901760
  %v523 = vsub.f32 %v150, %v522
  %v524 = vand.u32 %v523, 4294901760
  %525 = vmatpush.msra.mxu0 %v524
  %v526 = vand.u32 %v149, 4294901760
  %v527 = vsub.f32 %v149, %v526
  %v528 = vand.u32 %v527, 4294901760
  %529 = vmatpush.msra.mxu0 %v528
  %v530 = vand.u32 %v148, 4294901760
  %v531 = vsub.f32 %v148, %v530
  %v532 = vand.u32 %v531, 4294901760
  %533 = vmatpush.msra.mxu0 %v532
  %v534 = vand.u32 %v147, 4294901760
  %v535 = vsub.f32 %v147, %v534
  %v536 = vand.u32 %v535, 4294901760
  %537 = vmatpush.msra.mxu0 %v536
  %v538 = vand.u32 %v146, 4294901760
  %v539 = vsub.f32 %v146, %v538
  %v540 = vand.u32 %v539, 4294901760
  %541 = vmatpush.msra.mxu0 %v540
  %v542 = vand.u32 %v145, 4294901760
  %v543 = vsub.f32 %v145, %v542
  %v544 = vand.u32 %v543, 4294901760
  %545 = vmatpush.msra.mxu0 %v544
  %v546 = vand.u32 %v144, 4294901760
  %v547 = vsub.f32 %v144, %v546
  %v548 = vand.u32 %v547, 4294901760
  %549 = vmatpush.msra.mxu0 %v548
  %v550 = vand.u32 %v143, 4294901760
  %v551 = vsub.f32 %v143, %v550
  %v552 = vand.u32 %v551, 4294901760
  %553 = vmatpush.msra.mxu0 %v552
  %v554 = vand.u32 %v142, 4294901760
  %v555 = vsub.f32 %v142, %v554
  %v556 = vand.u32 %v555, 4294901760
  %557 = vmatpush.msra.mxu0 %v556
  %v558 = vand.u32 %v141, 4294901760
  %v559 = vsub.f32 %v141, %v558
  %v560 = vand.u32 %v559, 4294901760
  %561 = vmatpush.msra.mxu0 %v560
  %v562 = vand.u32 %v140, 4294901760
  %v563 = vsub.f32 %v140, %v562
  %v564 = vand.u32 %v563, 4294901760
  %565 = vmatpush.msra.mxu0 %v564
  %v566 = vand.u32 %v139, 4294901760
  %v567 = vsub.f32 %v139, %v566
  %v568 = vand.u32 %v567, 4294901760
  %569 = vmatpush.msra.mxu0 %v568
  %v570 = vand.u32 %v138, 4294901760
  %v571 = vsub.f32 %v138, %v570
  %v572 = vand.u32 %v571, 4294901760
  %573 = vmatpush.msra.mxu0 %v572
  %v574 = vand.u32 %v157, 4294901760
  %575 = vmatmul.f32.gmra.mxu0 %v574
  %v576 = vpop.f32.mrf.mxu0
  %v577 = vadd.f32 %v490, %v576
  %v578 = vand.u32 %v159, 4294901760
  %579 = vmatmul.f32.gmra.mxu0 %v578
  %v580 = vpop.f32.mrf.mxu0
  %v581 = vadd.f32 %v496, %v580
  %v582 = vand.u32 %v161, 4294901760
  %583 = vmatmul.f32.gmra.mxu0 %v582
  %v584 = vpop.f32.mrf.mxu0
  %v585 = vadd.f32 %v502, %v584
  %v586 = vand.u32 %v163, 4294901760
  %587 = vmatmul.f32.gmra.mxu0 %v586
  %v588 = vpop.f32.mrf.mxu0
  %v589 = vadd.f32 %v508, %v588
  %590 = vdwg.mxu0
  %v591 = vand.u32 %v153, 4294901760
  %592 = vmatpush.msra.mxu0 %v591
  %v593 = vand.u32 %v152, 4294901760
  %594 = vmatpush.msra.mxu0 %v593
  %v595 = vand.u32 %v151, 4294901760
  %596 = vmatpush.msra.mxu0 %v595
  %v597 = vand.u32 %v150, 4294901760
  %598 = vmatpush.msra.mxu0 %v597
  %v599 = vand.u32 %v149, 4294901760
  %600 = vmatpush.msra.mxu0 %v599
  %v601 = vand.u32 %v148, 4294901760
  %602 = vmatpush.msra.mxu0 %v601
  %v603 = vand.u32 %v147, 4294901760
  %604 = vmatpush.msra.mxu0 %v603
  %v605 = vand.u32 %v146, 4294901760
  %606 = vmatpush.msra.mxu0 %v605
  %v607 = vand.u32 %v145, 4294901760
  %608 = vmatpush.msra.mxu0 %v607
  %v609 = vand.u32 %v144, 4294901760
  %610 = vmatpush.msra.mxu0 %v609
  %v611 = vand.u32 %v143, 4294901760
  %612 = vmatpush.msra.mxu0 %v611
  %v613 = vand.u32 %v142, 4294901760
  %614 = vmatpush.msra.mxu0 %v613
  %v615 = vand.u32 %v141, 4294901760
  %616 = vmatpush.msra.mxu0 %v615
  %v617 = vand.u32 %v140, 4294901760
  %618 = vmatpush.msra.mxu0 %v617
  %v619 = vand.u32 %v139, 4294901760
  %620 = vmatpush.msra.mxu0 %v619
  %v621 = vand.u32 %v138, 4294901760
  %622 = vmatpush.msra.mxu0 %v621
  %v623 = vand.u32 %v157, 4294901760
  %624 = vmatmul.f32.gmra.mxu0 %v623
  %v625 = vpop.f32.mrf.mxu0
  %v626 = vadd.f32 %v577, %v625
  %v627 = vand.u32 %v159, 4294901760
  %628 = vmatmul.f32.gmra.mxu0 %v627
  %v629 = vpop.f32.mrf.mxu0
  %v630 = vadd.f32 %v581, %v629
  %v631 = vand.u32 %v161, 4294901760
  %632 = vmatmul.f32.gmra.mxu0 %v631
  %v633 = vpop.f32.mrf.mxu0
  %v634 = vadd.f32 %v585, %v633
  %v635 = vand.u32 %v163, 4294901760
  %636 = vmatmul.f32.gmra.mxu0 %v635
  %v637 = vpop.f32.mrf.mxu0
  %v638 = vadd.f32 %v589, %v637
  %639 = vdwg.mxu0
  %640 = vmatpush.msra.mxu0 0.0
  %641 = vmatpush.msra.mxu0 0.0
  %642 = vmatpush.msra.mxu0 0.0
  %643 = vmatpush.msra.mxu0 0.0
  %644 = vmatpush.msra.mxu0 0.0
  %645 = vmatpush.msra.mxu0 0.0
  %646 = vmatpush.msra.mxu0 0.0
  %647 = vmatpush.msra.mxu0 0.0
  %648 = vmatpush.msra.mxu0 0.0
  %649 = vmatpush.msra.mxu0 0.0
  %650 = vmatpush.msra.mxu0 0.0
  %651 = vmatpush.msra.mxu0 0.0
  %652 = vmatpush.msra.mxu0 0.0
  %v653 = vand.u32 %v204, 4294901760
  %654 = vmatpush.msra.mxu0 %v653
  %v655 = vand.u32 %v155, 4294901760
  %656 = vmatpush.msra.mxu0 %v655
  %v657 = vand.u32 %v154, 4294901760
  %658 = vmatpush.msra.mxu0 %v657
  %v659 = vand.u32 %v191, 4294901760
  %v660 = vsub.f32 %v191, %v659
  %v661 = vand.u32 %v660, 4294901760
  %v662 = vsub.f32 %v660, %v661
  %v663 = vand.u32 %v662, 4294901760
  %664 = vmatmul.f32.gmra.mxu0 %v663
  %v665 = vpop.f32.mrf.mxu0
  %v666 = vadd.f32 %v626, %v665
  %v667 = vand.u32 %v194, 4294901760
  %v668 = vsub.f32 %v194, %v667
  %v669 = vand.u32 %v668, 4294901760
  %v670 = vsub.f32 %v668, %v669
  %v671 = vand.u32 %v670, 4294901760
  %672 = vmatmul.f32.gmra.mxu0 %v671
  %v673 = vpop.f32.mrf.mxu0
  %v674 = vadd.f32 %v630, %v673
  %v675 = vand.u32 %v197, 4294901760
  %v676 = vsub.f32 %v197, %v675
  %v677 = vand.u32 %v676, 4294901760
  %v678 = vsub.f32 %v676, %v677
  %v679 = vand.u32 %v678, 4294901760
  %680 = vmatmul.f32.gmra.mxu0 %v679
  %v681 = vpop.f32.mrf.mxu0
  %v682 = vadd.f32 %v634, %v681
  %v683 = vand.u32 %v200, 4294901760
  %v684 = vsub.f32 %v200, %v683
  %v685 = vand.u32 %v684, 4294901760
  %v686 = vsub.f32 %v684, %v685
  %v687 = vand.u32 %v686, 4294901760
  %688 = vmatmul.f32.gmra.mxu0 %v687
  %v689 = vpop.f32.mrf.mxu0
  %v690 = vadd.f32 %v638, %v689
  %691 = vdwg.mxu0
  %692 = vmatpush.msra.mxu0 0.0
  %693 = vmatpush.msra.mxu0 0.0
  %694 = vmatpush.msra.mxu0 0.0
  %695 = vmatpush.msra.mxu0 0.0
  %696 = vmatpush.msra.mxu0 0.0
  %697 = vmatpush.msra.mxu0 0.0
  %698 = vmatpush.msra.mxu0 0.0
  %699 = vmatpush.msra.mxu0 0.0
  %700 = vmatpush.msra.mxu0 0.0
  %701 = vmatpush.msra.mxu0 0.0
  %702 = vmatpush.msra.mxu0 0.0
  %703 = vmatpush.msra.mxu0 0.0
  %704 = vmatpush.msra.mxu0 0.0
  %v705 = vand.u32 %v204, 4294901760
  %v706 = vsub.f32 %v204, %v705
  %v707 = vand.u32 %v706, 4294901760
  %v708 = vsub.f32 %v706, %v707
  %v709 = vand.u32 %v708, 4294901760
  %710 = vmatpush.msra.mxu0 %v709
  %v711 = vand.u32 %v155, 4294901760
  %v712 = vsub.f32 %v155, %v711
  %v713 = vand.u32 %v712, 4294901760
  %v714 = vsub.f32 %v712, %v713
  %v715 = vand.u32 %v714, 4294901760
  %716 = vmatpush.msra.mxu0 %v715
  %v717 = vand.u32 %v154, 4294901760
  %v718 = vsub.f32 %v154, %v717
  %v719 = vand.u32 %v718, 4294901760
  %v720 = vsub.f32 %v718, %v719
  %v721 = vand.u32 %v720, 4294901760
  %722 = vmatpush.msra.mxu0 %v721
  %v723 = vand.u32 %v191, 4294901760
  %724 = vmatmul.f32.gmra.mxu0 %v723
  %v725 = vpop.f32.mrf.mxu0
  %v726 = vadd.f32 %v666, %v725
  %v727 = vand.u32 %v194, 4294901760
  %728 = vmatmul.f32.gmra.mxu0 %v727
  %v729 = vpop.f32.mrf.mxu0
  %v730 = vadd.f32 %v674, %v729
  %v731 = vand.u32 %v197, 4294901760
  %732 = vmatmul.f32.gmra.mxu0 %v731
  %v733 = vpop.f32.mrf.mxu0
  %v734 = vadd.f32 %v682, %v733
  %v735 = vand.u32 %v200, 4294901760
  %736 = vmatmul.f32.gmra.mxu0 %v735
  %v737 = vpop.f32.mrf.mxu0
  %v738 = vadd.f32 %v690, %v737
  %739 = vdwg.mxu0
  %740 = vmatpush.msra.mxu0 0.0
  %741 = vmatpush.msra.mxu0 0.0
  %742 = vmatpush.msra.mxu0 0.0
  %743 = vmatpush.msra.mxu0 0.0
  %744 = vmatpush.msra.mxu0 0.0
  %745 = vmatpush.msra.mxu0 0.0
  %746 = vmatpush.msra.mxu0 0.0
  %747 = vmatpush.msra.mxu0 0.0
  %748 = vmatpush.msra.mxu0 0.0
  %749 = vmatpush.msra.mxu0 0.0
  %750 = vmatpush.msra.mxu0 0.0
  %751 = vmatpush.msra.mxu0 0.0
  %752 = vmatpush.msra.mxu0 0.0
  %v753 = vand.u32 %v204, 4294901760
  %v754 = vsub.f32 %v204, %v753
  %755 = vmatpush.msra.mxu0 %v754
  %v756 = vand.u32 %v155, 4294901760
  %v757 = vsub.f32 %v155, %v756
  %758 = vmatpush.msra.mxu0 %v757
  %v759 = vand.u32 %v154, 4294901760
  %v760 = vsub.f32 %v154, %v759
  %761 = vmatpush.msra.mxu0 %v760
  %v762 = vand.u32 %v191, 4294901760
  %v763 = vsub.f32 %v191, %v762
  %764 = vmatmul.f32.gmra.mxu0 %v763
  %v765 = vpop.f32.mrf.mxu0
  %v766 = vadd.f32 %v726, %v765
  %v767 = vand.u32 %v194, 4294901760
  %v768 = vsub.f32 %v194, %v767
  %769 = vmatmul.f32.gmra.mxu0 %v768
  %v770 = vpop.f32.mrf.mxu0
  %v771 = vadd.f32 %v730, %v770
  %v772 = vand.u32 %v197, 4294901760
  %v773 = vsub.f32 %v197, %v772
  %774 = vmatmul.f32.gmra.mxu0 %v773
  %v775 = vpop.f32.mrf.mxu0
  %v776 = vadd.f32 %v734, %v775
  %v777 = vand.u32 %v200, 4294901760
  %v778 = vsub.f32 %v200, %v777
  %779 = vmatmul.f32.gmra.mxu0 %v778
  %v780 = vpop.f32.mrf.mxu0
  %v781 = vadd.f32 %v738, %v780
  %782 = vdwg.mxu0
  %783 = vmatpush.msra.mxu0 0.0
  %784 = vmatpush.msra.mxu0 0.0
  %785 = vmatpush.msra.mxu0 0.0
  %786 = vmatpush.msra.mxu0 0.0
  %787 = vmatpush.msra.mxu0 0.0
  %788 = vmatpush.msra.mxu0 0.0
  %789 = vmatpush.msra.mxu0 0.0
  %790 = vmatpush.msra.mxu0 0.0
  %791 = vmatpush.msra.mxu0 0.0
  %792 = vmatpush.msra.mxu0 0.0
  %793 = vmatpush.msra.mxu0 0.0
  %794 = vmatpush.msra.mxu0 0.0
  %795 = vmatpush.msra.mxu0 0.0
  %v796 = vand.u32 %v204, 4294901760
  %797 = vmatpush.msra.mxu0 %v796
  %v798 = vand.u32 %v155, 4294901760
  %799 = vmatpush.msra.mxu0 %v798
  %v800 = vand.u32 %v154, 4294901760
  %801 = vmatpush.msra.mxu0 %v800
  %v802 = vand.u32 %v191, 4294901760
  %v803 = vsub.f32 %v191, %v802
  %v804 = vand.u32 %v803, 4294901760
  %805 = vmatmul.f32.gmra.mxu0 %v804
  %v806 = vpop.f32.mrf.mxu0
  %v807 = vadd.f32 %v766, %v806
  %v808 = vand.u32 %v194, 4294901760
  %v809 = vsub.f32 %v194, %v808
  %v810 = vand.u32 %v809, 4294901760
  %811 = vmatmul.f32.gmra.mxu0 %v810
  %v812 = vpop.f32.mrf.mxu0
  %v813 = vadd.f32 %v771, %v812
  %v814 = vand.u32 %v197, 4294901760
  %v815 = vsub.f32 %v197, %v814
  %v816 = vand.u32 %v815, 4294901760
  %817 = vmatmul.f32.gmra.mxu0 %v816
  %v818 = vpop.f32.mrf.mxu0
  %v819 = vadd.f32 %v776, %v818
  %v820 = vand.u32 %v200, 4294901760
  %v821 = vsub.f32 %v200, %v820
  %v822 = vand.u32 %v821, 4294901760
  %823 = vmatmul.f32.gmra.mxu0 %v822
  %v824 = vpop.f32.mrf.mxu0
  %v825 = vadd.f32 %v781, %v824
  %826 = vdwg.mxu0
  %827 = vmatpush.msra.mxu0 0.0
  %828 = vmatpush.msra.mxu0 0.0
  %829 = vmatpush.msra.mxu0 0.0
  %830 = vmatpush.msra.mxu0 0.0
  %831 = vmatpush.msra.mxu0 0.0
  %832 = vmatpush.msra.mxu0 0.0
  %833 = vmatpush.msra.mxu0 0.0
  %834 = vmatpush.msra.mxu0 0.0
  %835 = vmatpush.msra.mxu0 0.0
  %836 = vmatpush.msra.mxu0 0.0
  %837 = vmatpush.msra.mxu0 0.0
  %838 = vmatpush.msra.mxu0 0.0
  %839 = vmatpush.msra.mxu0 0.0
  %v840 = vand.u32 %v204, 4294901760
  %v841 = vsub.f32 %v204, %v840
  %v842 = vand.u32 %v841, 4294901760
  %843 = vmatpush.msra.mxu0 %v842
  %v844 = vand.u32 %v155, 4294901760
  %v845 = vsub.f32 %v155, %v844
  %v846 = vand.u32 %v845, 4294901760
  %847 = vmatpush.msra.mxu0 %v846
  %v848 = vand.u32 %v154, 4294901760
  %v849 = vsub.f32 %v154, %v848
  %v850 = vand.u32 %v849, 4294901760
  %851 = vmatpush.msra.mxu0 %v850
  %v852 = vand.u32 %v191, 4294901760
  %853 = vmatmul.f32.gmra.mxu0 %v852
  %v854 = vpop.f32.mrf.mxu0
  %v855 = vadd.f32 %v807, %v854
  %v856 = vand.u32 %v194, 4294901760
  %857 = vmatmul.f32.gmra.mxu0 %v856
  %v858 = vpop.f32.mrf.mxu0
  %v859 = vadd.f32 %v813, %v858
  %v860 = vand.u32 %v197, 4294901760
  %861 = vmatmul.f32.gmra.mxu0 %v860
  %v862 = vpop.f32.mrf.mxu0
  %v863 = vadd.f32 %v819, %v862
  %v864 = vand.u32 %v200, 4294901760
  %865 = vmatmul.f32.gmra.mxu0 %v864
  %v866 = vpop.f32.mrf.mxu0
  %v867 = vadd.f32 %v825, %v866
  %868 = vdwg.mxu0
  %869 = vmatpush.msra.mxu0 0.0
  %870 = vmatpush.msra.mxu0 0.0
  %871 = vmatpush.msra.mxu0 0.0
  %872 = vmatpush.msra.mxu0 0.0
  %873 = vmatpush.msra.mxu0 0.0
  %874 = vmatpush.msra.mxu0 0.0
  %875 = vmatpush.msra.mxu0 0.0
  %876 = vmatpush.msra.mxu0 0.0
  %877 = vmatpush.msra.mxu0 0.0
  %878 = vmatpush.msra.mxu0 0.0
  %879 = vmatpush.msra.mxu0 0.0
  %880 = vmatpush.msra.mxu0 0.0
  %881 = vmatpush.msra.mxu0 0.0
  %v882 = vand.u32 %v204, 4294901760
  %883 = vmatpush.msra.mxu0 %v882
  %v884 = vand.u32 %v155, 4294901760
  %885 = vmatpush.msra.mxu0 %v884
  %v886 = vand.u32 %v154, 4294901760
  %887 = vmatpush.msra.mxu0 %v886
  %v888 = vand.u32 %v191, 4294901760
  %889 = vmatmul.f32.gmra.mxu0 %v888
  %v890 = vpop.f32.mrf.mxu0
  %v891 = vadd.f32 %v855, %v890
  %v892 = vand.u32 %v194, 4294901760
  %893 = vmatmul.f32.gmra.mxu0 %v892
  %v894 = vpop.f32.mrf.mxu0
  %v895 = vadd.f32 %v859, %v894
  %v896 = vand.u32 %v197, 4294901760
  %897 = vmatmul.f32.gmra.mxu0 %v896
  %v898 = vpop.f32.mrf.mxu0
  %v899 = vadd.f32 %v863, %v898
  %v900 = vand.u32 %v200, 4294901760
  %901 = vmatmul.f32.gmra.mxu0 %v900
  %v902 = vpop.f32.mrf.mxu0
  %v903 = vadd.f32 %v867, %v902
  %904 = vdwg.mxu0
  %v905 = vmax.f32 %v891, 0.0
  %v906 = vmax.f32 %v895, 0.0
  %v907 = vmax.f32 %v899, 0.0
  %v908 = vmax.f32 %v903, 0.0
  %v909 = vld [vmem:[%s4] sm:$0xff]
  %v910 = vld [vmem:[%s4 + $0x8] sm:$0xff]
  %v911 = vld [vmem:[%s5] sm:$0xff]
  %v912 = vld [vmem:[%s5 + $0x8] sm:$0xff]
  %914 = vset.pattern.permute.xlu0 0
  %915 = vperm.xlu0 %914, %v911
  %v916 = vpop.permute.xlu0 %915
  %919 = vset.pattern.permute.xlu0 0
  %920 = vperm.xlu0 %919, %v912
  %v921 = vpop.permute.xlu0 %920
  %vm923 = vcmask 261120
  %v925 = vsel %vm923, %v909, 0
  %v928 = vsel %vm923, %v910, 0
  %930 = vmatpush.msra.mxu0 0.0
  %931 = vmatpush.msra.mxu0 0.0
  %932 = vmatpush.msra.mxu0 0.0
  %933 = vmatpush.msra.mxu0 0.0
  %934 = vmatpush.msra.mxu0 0.0
  %935 = vmatpush.msra.mxu0 0.0
  %936 = vmatpush.msra.mxu0 0.0
  %937 = vmatpush.msra.mxu0 0.0
  %938 = vmatpush.msra.mxu0 0.0
  %939 = vmatpush.msra.mxu0 0.0
  %940 = vmatpush.msra.mxu0 0.0
  %941 = vmatpush.msra.mxu0 0.0
  %v942 = vand.u32 %v908, 4294901760
  %943 = vmatpush.msra.mxu0 %v942
  %v944 = vand.u32 %v907, 4294901760
  %945 = vmatpush.msra.mxu0 %v944
  %v946 = vand.u32 %v906, 4294901760
  %947 = vmatpush.msra.mxu0 %v946
  %v948 = vand.u32 %v905, 4294901760
  %949 = vmatpush.msra.mxu0 %v948
  %v950 = vand.u32 %v925, 4294901760
  %v951 = vsub.f32 %v925, %v950
  %v952 = vand.u32 %v951, 4294901760
  %v953 = vsub.f32 %v951, %v952
  %v954 = vand.u32 %v953, 4294901760
  %955 = vmatmul.f32.gmra.mxu0 %v954
  %v956 = vpop.f32.mrf.mxu0
  %v957 = vadd.f32 %v916, %v956
  %v958 = vand.u32 %v928, 4294901760
  %v959 = vsub.f32 %v928, %v958
  %v960 = vand.u32 %v959, 4294901760
  %v961 = vsub.f32 %v959, %v960
  %v962 = vand.u32 %v961, 4294901760
  %963 = vmatmul.f32.gmra.mxu0 %v962
  %v964 = vpop.f32.mrf.mxu0
  %v965 = vadd.f32 %v921, %v964
  %966 = vdwg.mxu0
  %967 = vmatpush.msra.mxu0 0.0
  %968 = vmatpush.msra.mxu0 0.0
  %969 = vmatpush.msra.mxu0 0.0
  %970 = vmatpush.msra.mxu0 0.0
  %971 = vmatpush.msra.mxu0 0.0
  %972 = vmatpush.msra.mxu0 0.0
  %973 = vmatpush.msra.mxu0 0.0
  %974 = vmatpush.msra.mxu0 0.0
  %975 = vmatpush.msra.mxu0 0.0
  %976 = vmatpush.msra.mxu0 0.0
  %977 = vmatpush.msra.mxu0 0.0
  %978 = vmatpush.msra.mxu0 0.0
  %v979 = vand.u32 %v908, 4294901760
  %v980 = vsub.f32 %v908, %v979
  %v981 = vand.u32 %v980, 4294901760
  %v982 = vsub.f32 %v980, %v981
  %v983 = vand.u32 %v982, 4294901760
  %984 = vmatpush.msra.mxu0 %v983
  %v985 = vand.u32 %v907, 4294901760
  %v986 = vsub.f32 %v907, %v985
  %v987 = vand.u32 %v986, 4294901760
  %v988 = vsub.f32 %v986, %v987
  %v989 = vand.u32 %v988, 4294901760
  %990 = vmatpush.msra.mxu0 %v989
  %v991 = vand.u32 %v906, 4294901760
  %v992 = vsub.f32 %v906, %v991
  %v993 = vand.u32 %v992, 4294901760
  %v994 = vsub.f32 %v992, %v993
  %v995 = vand.u32 %v994, 4294901760
  %996 = vmatpush.msra.mxu0 %v995
  %v997 = vand.u32 %v905, 4294901760
  %v998 = vsub.f32 %v905, %v997
  %v999 = vand.u32 %v998, 4294901760
  %v1000 = vsub.f32 %v998, %v999
  %v1001 = vand.u32 %v1000, 4294901760
  %1002 = vmatpush.msra.mxu0 %v1001
  %v1003 = vand.u32 %v925, 4294901760
  %1004 = vmatmul.f32.gmra.mxu0 %v1003
  %v1005 = vpop.f32.mrf.mxu0
  %v1006 = vadd.f32 %v957, %v1005
  %v1007 = vand.u32 %v928, 4294901760
  %1008 = vmatmul.f32.gmra.mxu0 %v1007
  %v1009 = vpop.f32.mrf.mxu0
  %v1010 = vadd.f32 %v965, %v1009
  %1011 = vdwg.mxu0
  %1012 = vmatpush.msra.mxu0 0.0
  %1013 = vmatpush.msra.mxu0 0.0
  %1014 = vmatpush.msra.mxu0 0.0
  %1015 = vmatpush.msra.mxu0 0.0
  %1016 = vmatpush.msra.mxu0 0.0
  %1017 = vmatpush.msra.mxu0 0.0
  %1018 = vmatpush.msra.mxu0 0.0
  %1019 = vmatpush.msra.mxu0 0.0
  %1020 = vmatpush.msra.mxu0 0.0
  %1021 = vmatpush.msra.mxu0 0.0
  %1022 = vmatpush.msra.mxu0 0.0
  %1023 = vmatpush.msra.mxu0 0.0
  %v1024 = vand.u32 %v908, 4294901760
  %v1025 = vsub.f32 %v908, %v1024
  %1026 = vmatpush.msra.mxu0 %v1025
  %v1027 = vand.u32 %v907, 4294901760
  %v1028 = vsub.f32 %v907, %v1027
  %1029 = vmatpush.msra.mxu0 %v1028
  %v1030 = vand.u32 %v906, 4294901760
  %v1031 = vsub.f32 %v906, %v1030
  %1032 = vmatpush.msra.mxu0 %v1031
  %v1033 = vand.u32 %v905, 4294901760
  %v1034 = vsub.f32 %v905, %v1033
  %1035 = vmatpush.msra.mxu0 %v1034
  %v1036 = vand.u32 %v925, 4294901760
  %v1037 = vsub.f32 %v925, %v1036
  %1038 = vmatmul.f32.gmra.mxu0 %v1037
  %v1039 = vpop.f32.mrf.mxu0
  %v1040 = vadd.f32 %v1006, %v1039
  %v1041 = vand.u32 %v928, 4294901760
  %v1042 = vsub.f32 %v928, %v1041
  %1043 = vmatmul.f32.gmra.mxu0 %v1042
  %v1044 = vpop.f32.mrf.mxu0
  %v1045 = vadd.f32 %v1010, %v1044
  %1046 = vdwg.mxu0
  %1047 = vmatpush.msra.mxu0 0.0
  %1048 = vmatpush.msra.mxu0 0.0
  %1049 = vmatpush.msra.mxu0 0.0
  %1050 = vmatpush.msra.mxu0 0.0
  %1051 = vmatpush.msra.mxu0 0.0
  %1052 = vmatpush.msra.mxu0 0.0
  %1053 = vmatpush.msra.mxu0 0.0
  %1054 = vmatpush.msra.mxu0 0.0
  %1055 = vmatpush.msra.mxu0 0.0
  %1056 = vmatpush.msra.mxu0 0.0
  %1057 = vmatpush.msra.mxu0 0.0
  %1058 = vmatpush.msra.mxu0 0.0
  %v1059 = vand.u32 %v908, 4294901760
  %1060 = vmatpush.msra.mxu0 %v1059
  %v1061 = vand.u32 %v907, 4294901760
  %1062 = vmatpush.msra.mxu0 %v1061
  %v1063 = vand.u32 %v906, 4294901760
  %1064 = vmatpush.msra.mxu0 %v1063
  %v1065 = vand.u32 %v905, 4294901760
  %1066 = vmatpush.msra.mxu0 %v1065
  %v1067 = vand.u32 %v925, 4294901760
  %v1068 = vsub.f32 %v925, %v1067
  %v1069 = vand.u32 %v1068, 4294901760
  %1070 = vmatmul.f32.gmra.mxu0 %v1069
  %v1071 = vpop.f32.mrf.mxu0
  %v1072 = vadd.f32 %v1040, %v1071
  %v1073 = vand.u32 %v928, 4294901760
  %v1074 = vsub.f32 %v928, %v1073
  %v1075 = vand.u32 %v1074, 4294901760
  %1076 = vmatmul.f32.gmra.mxu0 %v1075
  %v1077 = vpop.f32.mrf.mxu0
  %v1078 = vadd.f32 %v1045, %v1077
  %1079 = vdwg.mxu0
  %1080 = vmatpush.msra.mxu0 0.0
  %1081 = vmatpush.msra.mxu0 0.0
  %1082 = vmatpush.msra.mxu0 0.0
  %1083 = vmatpush.msra.mxu0 0.0
  %1084 = vmatpush.msra.mxu0 0.0
  %1085 = vmatpush.msra.mxu0 0.0
  %1086 = vmatpush.msra.mxu0 0.0
  %1087 = vmatpush.msra.mxu0 0.0
  %1088 = vmatpush.msra.mxu0 0.0
  %1089 = vmatpush.msra.mxu0 0.0
  %1090 = vmatpush.msra.mxu0 0.0
  %1091 = vmatpush.msra.mxu0 0.0
  %v1092 = vand.u32 %v908, 4294901760
  %v1093 = vsub.f32 %v908, %v1092
  %v1094 = vand.u32 %v1093, 4294901760
  %1095 = vmatpush.msra.mxu0 %v1094
  %v1096 = vand.u32 %v907, 4294901760
  %v1097 = vsub.f32 %v907, %v1096
  %v1098 = vand.u32 %v1097, 4294901760
  %1099 = vmatpush.msra.mxu0 %v1098
  %v1100 = vand.u32 %v906, 4294901760
  %v1101 = vsub.f32 %v906, %v1100
  %v1102 = vand.u32 %v1101, 4294901760
  %1103 = vmatpush.msra.mxu0 %v1102
  %v1104 = vand.u32 %v905, 4294901760
  %v1105 = vsub.f32 %v905, %v1104
  %v1106 = vand.u32 %v1105, 4294901760
  %1107 = vmatpush.msra.mxu0 %v1106
  %v1108 = vand.u32 %v925, 4294901760
  %1109 = vmatmul.f32.gmra.mxu0 %v1108
  %v1110 = vpop.f32.mrf.mxu0
  %v1111 = vadd.f32 %v1072, %v1110
  %v1112 = vand.u32 %v928, 4294901760
  %1113 = vmatmul.f32.gmra.mxu0 %v1112
  %v1114 = vpop.f32.mrf.mxu0
  %v1115 = vadd.f32 %v1078, %v1114
  %1116 = vdwg.mxu0
  %1117 = vmatpush.msra.mxu0 0.0
  %1118 = vmatpush.msra.mxu0 0.0
  %1119 = vmatpush.msra.mxu0 0.0
  %1120 = vmatpush.msra.mxu0 0.0
  %1121 = vmatpush.msra.mxu0 0.0
  %1122 = vmatpush.msra.mxu0 0.0
  %1123 = vmatpush.msra.mxu0 0.0
  %1124 = vmatpush.msra.mxu0 0.0
  %1125 = vmatpush.msra.mxu0 0.0
  %1126 = vmatpush.msra.mxu0 0.0
  %1127 = vmatpush.msra.mxu0 0.0
  %1128 = vmatpush.msra.mxu0 0.0
  %v1129 = vand.u32 %v908, 4294901760
  %1130 = vmatpush.msra.mxu0 %v1129
  %v1131 = vand.u32 %v907, 4294901760
  %1132 = vmatpush.msra.mxu0 %v1131
  %v1133 = vand.u32 %v906, 4294901760
  %1134 = vmatpush.msra.mxu0 %v1133
  %v1135 = vand.u32 %v905, 4294901760
  %1136 = vmatpush.msra.mxu0 %v1135
  %v1137 = vand.u32 %v925, 4294901760
  %1138 = vmatmul.f32.gmra.mxu0 %v1137
  %v1139 = vpop.f32.mrf.mxu0
  %v1140 = vadd.f32 %v1111, %v1139
  %v1141 = vand.u32 %v928, 4294901760
  %1142 = vmatmul.f32.gmra.mxu0 %v1141
  %v1143 = vpop.f32.mrf.mxu0
  %v1144 = vadd.f32 %v1115, %v1143
  %1145 = vdwg.mxu0
  %v1146 = vmax.f32 %v1140, 0.0
  %v1147 = vmax.f32 %v1144, 0.0
  %v1148 = vld [vmem:[%s6] sm:$0xff]
  %v1149 = vld [vmem:[%s7] sm:$0xff]
  %1151 = vset.pattern.permute.xlu0 0
  %1152 = vperm.xlu0 %1151, %v1149
  %v1153 = vpop.permute.xlu0 %1152
  %vm1155 = vcmask 130048
  %v1157 = vsel %vm1155, %v1148, 0
  %1159 = vmatpush.msra.mxu0 0.0
  %1160 = vmatpush.msra.mxu0 0.0
  %1161 = vmatpush.msra.mxu0 0.0
  %1162 = vmatpush.msra.mxu0 0.0
  %1163 = vmatpush.msra.mxu0 0.0
  %1164 = vmatpush.msra.mxu0 0.0
  %1165 = vmatpush.msra.mxu0 0.0
  %1166 = vmatpush.msra.mxu0 0.0
  %1167 = vmatpush.msra.mxu0 0.0
  %1168 = vmatpush.msra.mxu0 0.0
  %1169 = vmatpush.msra.mxu0 0.0
  %1170 = vmatpush.msra.mxu0 0.0
  %1171 = vmatpush.msra.mxu0 0.0
  %1172 = vmatpush.msra.mxu0 0.0
  %v1173 = vand.u32 %v1147, 4294901760
  %1174 = vmatpush.msra.mxu0 %v1173
  %v1175 = vand.u32 %v1146, 4294901760
  %1176 = vmatpush.msra.mxu0 %v1175
  %v1177 = vand.u32 %v1157, 4294901760
  %v1178 = vsub.f32 %v1157, %v1177
  %v1179 = vand.u32 %v1178, 4294901760
  %v1180 = vsub.f32 %v1178, %v1179
  %v1181 = vand.u32 %v1180, 4294901760
  %1182 = vmatmul.f32.gmra.mxu0 %v1181
  %v1183 = vpop.f32.mrf.mxu0
  %v1184 = vadd.f32 %v1153, %v1183
  %1185 = vdwg.mxu0
  %1186 = vmatpush.msra.mxu0 0.0
  %1187 = vmatpush.msra.mxu0 0.0
  %1188 = vmatpush.msra.mxu0 0.0
  %1189 = vmatpush.msra.mxu0 0.0
  %1190 = vmatpush.msra.mxu0 0.0
  %1191 = vmatpush.msra.mxu0 0.0
  %1192 = vmatpush.msra.mxu0 0.0
  %1193 = vmatpush.msra.mxu0 0.0
  %1194 = vmatpush.msra.mxu0 0.0
  %1195 = vmatpush.msra.mxu0 0.0
  %1196 = vmatpush.msra.mxu0 0.0
  %1197 = vmatpush.msra.mxu0 0.0
  %1198 = vmatpush.msra.mxu0 0.0
  %1199 = vmatpush.msra.mxu0 0.0
  %v1200 = vand.u32 %v1147, 4294901760
  %v1201 = vsub.f32 %v1147, %v1200
  %v1202 = vand.u32 %v1201, 4294901760
  %v1203 = vsub.f32 %v1201, %v1202
  %v1204 = vand.u32 %v1203, 4294901760
  %1205 = vmatpush.msra.mxu0 %v1204
  %v1206 = vand.u32 %v1146, 4294901760
  %v1207 = vsub.f32 %v1146, %v1206
  %v1208 = vand.u32 %v1207, 4294901760
  %v1209 = vsub.f32 %v1207, %v1208
  %v1210 = vand.u32 %v1209, 4294901760
  %1211 = vmatpush.msra.mxu0 %v1210
  %v1212 = vand.u32 %v1157, 4294901760
  %1213 = vmatmul.f32.gmra.mxu0 %v1212
  %v1214 = vpop.f32.mrf.mxu0
  %v1215 = vadd.f32 %v1184, %v1214
  %1216 = vdwg.mxu0
  %1217 = vmatpush.msra.mxu0 0.0
  %1218 = vmatpush.msra.mxu0 0.0
  %1219 = vmatpush.msra.mxu0 0.0
  %1220 = vmatpush.msra.mxu0 0.0
  %1221 = vmatpush.msra.mxu0 0.0
  %1222 = vmatpush.msra.mxu0 0.0
  %1223 = vmatpush.msra.mxu0 0.0
  %1224 = vmatpush.msra.mxu0 0.0
  %1225 = vmatpush.msra.mxu0 0.0
  %1226 = vmatpush.msra.mxu0 0.0
  %1227 = vmatpush.msra.mxu0 0.0
  %1228 = vmatpush.msra.mxu0 0.0
  %1229 = vmatpush.msra.mxu0 0.0
  %1230 = vmatpush.msra.mxu0 0.0
  %v1231 = vand.u32 %v1147, 4294901760
  %v1232 = vsub.f32 %v1147, %v1231
  %1233 = vmatpush.msra.mxu0 %v1232
  %v1234 = vand.u32 %v1146, 4294901760
  %v1235 = vsub.f32 %v1146, %v1234
  %1236 = vmatpush.msra.mxu0 %v1235
  %v1237 = vand.u32 %v1157, 4294901760
  %v1238 = vsub.f32 %v1157, %v1237
  %1239 = vmatmul.f32.gmra.mxu0 %v1238
  %v1240 = vpop.f32.mrf.mxu0
  %v1241 = vadd.f32 %v1215, %v1240
  %1242 = vdwg.mxu0
  %1243 = vmatpush.msra.mxu0 0.0
  %1244 = vmatpush.msra.mxu0 0.0
  %1245 = vmatpush.msra.mxu0 0.0
  %1246 = vmatpush.msra.mxu0 0.0
  %1247 = vmatpush.msra.mxu0 0.0
  %1248 = vmatpush.msra.mxu0 0.0
  %1249 = vmatpush.msra.mxu0 0.0
  %1250 = vmatpush.msra.mxu0 0.0
  %1251 = vmatpush.msra.mxu0 0.0
  %1252 = vmatpush.msra.mxu0 0.0
  %1253 = vmatpush.msra.mxu0 0.0
  %1254 = vmatpush.msra.mxu0 0.0
  %1255 = vmatpush.msra.mxu0 0.0
  %1256 = vmatpush.msra.mxu0 0.0
  %v1257 = vand.u32 %v1147, 4294901760
  %1258 = vmatpush.msra.mxu0 %v1257
  %v1259 = vand.u32 %v1146, 4294901760
  %1260 = vmatpush.msra.mxu0 %v1259
  %v1261 = vand.u32 %v1157, 4294901760
  %v1262 = vsub.f32 %v1157, %v1261
  %v1263 = vand.u32 %v1262, 4294901760
  %1264 = vmatmul.f32.gmra.mxu0 %v1263
  %v1265 = vpop.f32.mrf.mxu0
  %v1266 = vadd.f32 %v1241, %v1265
  %1267 = vdwg.mxu0
  %1268 = vmatpush.msra.mxu0 0.0
  %1269 = vmatpush.msra.mxu0 0.0
  %1270 = vmatpush.msra.mxu0 0.0
  %1271 = vmatpush.msra.mxu0 0.0
  %1272 = vmatpush.msra.mxu0 0.0
  %1273 = vmatpush.msra.mxu0 0.0
  %1274 = vmatpush.msra.mxu0 0.0
  %1275 = vmatpush.msra.mxu0 0.0
  %1276 = vmatpush.msra.mxu0 0.0
  %1277 = vmatpush.msra.mxu0 0.0
  %1278 = vmatpush.msra.mxu0 0.0
  %1279 = vmatpush.msra.mxu0 0.0
  %1280 = vmatpush.msra.mxu0 0.0
  %1281 = vmatpush.msra.mxu0 0.0
  %v1282 = vand.u32 %v1147, 4294901760
  %v1283 = vsub.f32 %v1147, %v1282
  %v1284 = vand.u32 %v1283, 4294901760
  %1285 = vmatpush.msra.mxu0 %v1284
  %v1286 = vand.u32 %v1146, 4294901760
  %v1287 = vsub.f32 %v1146, %v1286
  %v1288 = vand.u32 %v1287, 4294901760
  %1289 = vmatpush.msra.mxu0 %v1288
  %v1290 = vand.u32 %v1157, 4294901760
  %1291 = vmatmul.f32.gmra.mxu0 %v1290
  %v1292 = vpop.f32.mrf.mxu0
  %v1293 = vadd.f32 %v1266, %v1292
  %1294 = vdwg.mxu0
  %1295 = vmatpush.msra.mxu0 0.0
  %1296 = vmatpush.msra.mxu0 0.0
  %1297 = vmatpush.msra.mxu0 0.0
  %1298 = vmatpush.msra.mxu0 0.0
  %1299 = vmatpush.msra.mxu0 0.0
  %1300 = vmatpush.msra.mxu0 0.0
  %1301 = vmatpush.msra.mxu0 0.0
  %1302 = vmatpush.msra.mxu0 0.0
  %1303 = vmatpush.msra.mxu0 0.0
  %1304 = vmatpush.msra.mxu0 0.0
  %1305 = vmatpush.msra.mxu0 0.0
  %1306 = vmatpush.msra.mxu0 0.0
  %1307 = vmatpush.msra.mxu0 0.0
  %1308 = vmatpush.msra.mxu0 0.0
  %v1309 = vand.u32 %v1147, 4294901760
  %1310 = vmatpush.msra.mxu0 %v1309
  %v1311 = vand.u32 %v1146, 4294901760
  %1312 = vmatpush.msra.mxu0 %v1311
  %v1313 = vand.u32 %v1157, 4294901760
  %1314 = vmatmul.f32.gmra.mxu0 %v1313
  %v1315 = vpop.f32.mrf.mxu0
  %v1316 = vadd.f32 %v1293, %v1315
  %1317 = vdwg.mxu0
  %v1318 = vmax.f32 %v1316, 0.0
  %v1319 = vld [vmem:[%s8] sm:$0x1]
  %v1320 = vld [vmem:[#allocation2] sm:$0x1]
  %1322 = vset.pattern.permute.xlu0 0
  %1323 = vperm.xlu0 %1322, %v1320
  %v1324 = vpop.permute.xlu0 %1323
  %v1326 = vperm.slane %v1324, 0
  %vm1327 = vcmask 64512
  %v1329 = vsel %vm1327, %v1319, 0
  %1331 = vmatpush.msra.mxu0 0.0
  %1332 = vmatpush.msra.mxu0 0.0
  %1333 = vmatpush.msra.mxu0 0.0
  %1334 = vmatpush.msra.mxu0 0.0
  %1335 = vmatpush.msra.mxu0 0.0
  %1336 = vmatpush.msra.mxu0 0.0
  %1337 = vmatpush.msra.mxu0 0.0
  %1338 = vmatpush.msra.mxu0 0.0
  %1339 = vmatpush.msra.mxu0 0.0
  %1340 = vmatpush.msra.mxu0 0.0
  %1341 = vmatpush.msra.mxu0 0.0
  %1342 = vmatpush.msra.mxu0 0.0
  %1343 = vmatpush.msra.mxu0 0.0
  %1344 = vmatpush.msra.mxu0 0.0
  %1345 = vmatpush.msra.mxu0 0.0
  %v1346 = vand.u32 %v1318, 4294901760
  %1347 = vmatpush.msra.mxu0 %v1346
  %v1348 = vand.u32 %v1329, 4294901760
  %v1349 = vsub.f32 %v1329, %v1348
  %v1350 = vand.u32 %v1349, 4294901760
  %v1351 = vsub.f32 %v1349, %v1350
  %v1352 = vand.u32 %v1351, 4294901760
  %1353 = vmatmul.f32.gmra.mxu0 %v1352
  %v1354 = vpop.f32.mrf.mxu0
  %v1355 = vadd.f32 %v1326, %v1354
  %1356 = vdwg.mxu0
  %1357 = vmatpush.msra.mxu0 0.0
  %1358 = vmatpush.msra.mxu0 0.0
  %1359 = vmatpush.msra.mxu0 0.0
  %1360 = vmatpush.msra.mxu0 0.0
  %1361 = vmatpush.msra.mxu0 0.0
  %1362 = vmatpush.msra.mxu0 0.0
  %1363 = vmatpush.msra.mxu0 0.0
  %1364 = vmatpush.msra.mxu0 0.0
  %1365 = vmatpush.msra.mxu0 0.0
  %1366 = vmatpush.msra.mxu0 0.0
  %1367 = vmatpush.msra.mxu0 0.0
  %1368 = vmatpush.msra.mxu0 0.0
  %1369 = vmatpush.msra.mxu0 0.0
  %1370 = vmatpush.msra.mxu0 0.0
  %1371 = vmatpush.msra.mxu0 0.0
  %v1372 = vand.u32 %v1318, 4294901760
  %v1373 = vsub.f32 %v1318, %v1372
  %v1374 = vand.u32 %v1373, 4294901760
  %v1375 = vsub.f32 %v1373, %v1374
  %v1376 = vand.u32 %v1375, 4294901760
  %1377 = vmatpush.msra.mxu0 %v1376
  %v1378 = vand.u32 %v1329, 4294901760
  %1379 = vmatmul.f32.gmra.mxu0 %v1378
  %v1380 = vpop.f32.mrf.mxu0
  %v1381 = vadd.f32 %v1355, %v1380
  %1382 = vdwg.mxu0
  %1383 = vmatpush.msra.mxu0 0.0
  %1384 = vmatpush.msra.mxu0 0.0
  %1385 = vmatpush.msra.mxu0 0.0
  %1386 = vmatpush.msra.mxu0 0.0
  %1387 = vmatpush.msra.mxu0 0.0
  %1388 = vmatpush.msra.mxu0 0.0
  %1389 = vmatpush.msra.mxu0 0.0
  %1390 = vmatpush.msra.mxu0 0.0
  %1391 = vmatpush.msra.mxu0 0.0
  %1392 = vmatpush.msra.mxu0 0.0
  %1393 = vmatpush.msra.mxu0 0.0
  %1394 = vmatpush.msra.mxu0 0.0
  %1395 = vmatpush.msra.mxu0 0.0
  %1396 = vmatpush.msra.mxu0 0.0
  %1397 = vmatpush.msra.mxu0 0.0
  %v1398 = vand.u32 %v1318, 4294901760
  %v1399 = vsub.f32 %v1318, %v1398
  %1400 = vmatpush.msra.mxu0 %v1399
  %v1401 = vand.u32 %v1329, 4294901760
  %v1402 = vsub.f32 %v1329, %v1401
  %1403 = vmatmul.f32.gmra.mxu0 %v1402
  %v1404 = vpop.f32.mrf.mxu0
  %v1405 = vadd.f32 %v1381, %v1404
  %1406 = vdwg.mxu0
  %1407 = vmatpush.msra.mxu0 0.0
  %1408 = vmatpush.msra.mxu0 0.0
  %1409 = vmatpush.msra.mxu0 0.0
  %1410 = vmatpush.msra.mxu0 0.0
  %1411 = vmatpush.msra.mxu0 0.0
  %1412 = vmatpush.msra.mxu0 0.0
  %1413 = vmatpush.msra.mxu0 0.0
  %1414 = vmatpush.msra.mxu0 0.0
  %1415 = vmatpush.msra.mxu0 0.0
  %1416 = vmatpush.msra.mxu0 0.0
  %1417 = vmatpush.msra.mxu0 0.0
  %1418 = vmatpush.msra.mxu0 0.0
  %1419 = vmatpush.msra.mxu0 0.0
  %1420 = vmatpush.msra.mxu0 0.0
  %1421 = vmatpush.msra.mxu0 0.0
  %v1422 = vand.u32 %v1318, 4294901760
  %1423 = vmatpush.msra.mxu0 %v1422
  %v1424 = vand.u32 %v1329, 4294901760
  %v1425 = vsub.f32 %v1329, %v1424
  %v1426 = vand.u32 %v1425, 4294901760
  %1427 = vmatmul.f32.gmra.mxu0 %v1426
  %v1428 = vpop.f32.mrf.mxu0
  %v1429 = vadd.f32 %v1405, %v1428
  %1430 = vdwg.mxu0
  %1431 = vmatpush.msra.mxu0 0.0
  %1432 = vmatpush.msra.mxu0 0.0
  %1433 = vmatpush.msra.mxu0 0.0
  %1434 = vmatpush.msra.mxu0 0.0
  %1435 = vmatpush.msra.mxu0 0.0
  %1436 = vmatpush.msra.mxu0 0.0
  %1437 = vmatpush.msra.mxu0 0.0
  %1438 = vmatpush.msra.mxu0 0.0
  %1439 = vmatpush.msra.mxu0 0.0
  %1440 = vmatpush.msra.mxu0 0.0
  %1441 = vmatpush.msra.mxu0 0.0
  %1442 = vmatpush.msra.mxu0 0.0
  %1443 = vmatpush.msra.mxu0 0.0
  %1444 = vmatpush.msra.mxu0 0.0
  %1445 = vmatpush.msra.mxu0 0.0
  %v1446 = vand.u32 %v1318, 4294901760
  %v1447 = vsub.f32 %v1318, %v1446
  %v1448 = vand.u32 %v1447, 4294901760
  %1449 = vmatpush.msra.mxu0 %v1448
  %v1450 = vand.u32 %v1329, 4294901760
  %1451 = vmatmul.f32.gmra.mxu0 %v1450
  %v1452 = vpop.f32.mrf.mxu0
  %v1453 = vadd.f32 %v1429, %v1452
  %1454 = vdwg.mxu0
  %1455 = vmatpush.msra.mxu0 0.0
  %1456 = vmatpush.msra.mxu0 0.0
  %1457 = vmatpush.msra.mxu0 0.0
  %1458 = vmatpush.msra.mxu0 0.0
  %1459 = vmatpush.msra.mxu0 0.0
  %1460 = vmatpush.msra.mxu0 0.0
  %1461 = vmatpush.msra.mxu0 0.0
  %1462 = vmatpush.msra.mxu0 0.0
  %1463 = vmatpush.msra.mxu0 0.0
  %1464 = vmatpush.msra.mxu0 0.0
  %1465 = vmatpush.msra.mxu0 0.0
  %1466 = vmatpush.msra.mxu0 0.0
  %1467 = vmatpush.msra.mxu0 0.0
  %1468 = vmatpush.msra.mxu0 0.0
  %1469 = vmatpush.msra.mxu0 0.0
  %v1470 = vand.u32 %v1318, 4294901760
  %1471 = vmatpush.msra.mxu0 %v1470
  %v1472 = vand.u32 %v1329, 4294901760
  %1473 = vmatmul.f32.gmra.mxu0 %v1472
  %v1474 = vpop.f32.mrf.mxu0
  %v1475 = vadd.f32 %v1453, %v1474
  %1476 = vdwg.mxu0
  %v1477 = vxor.u32 %v1475, 2147483648
  %v1478 = vmul.f32 %v1477, 1.442695
  %v1479 = vpow.pop %v1478
  %v1480 = vadd.f32 %v1479, 1.0
  %v1481 = vrcp.pop %v1480
  %v1482 = vmul.f32 %v1480, %v1481
  %v1483 = vsub.f32 1.0, %v1482
  %v1484 = vmul.f32 %v1481, %v1483
  %v1485 = vadd.f32 %v1481, %v1484
  %vm1486 = vweird.f32 %v1480
  %vm1487 = vweird.f32 %v1481
  %vm1488 = vmor %vm1486, %vm1487
  %v1489 = vsel %vm1488, %v1481, %v1485
  %v1490 = vand.u32 2147483647, %v1480
  %vm1491 = vcmp.eq.f32.partialorder %v1490, 8.507059e+37
  %v1492 = vand.u32 %v1480, 2147483648
  %v1493 = vor.u32 1.1754944e-38, %v1492
  %v1494 = vsel %vm1491, %v1493, %v1489
  %v1495 = vmul.f32 1.0, %v1494
  %v1496 = vmul.f32 %v1495, 5.0
  %1497 = vst [vmem:[%s10] sm:$0x1] %v1496
  // Predicated region
  $region42: #{recommender_forward.1} parent=0 // pred_check
    _
  $region43: #{recommender_forward.1} parent=0 // pred_check_branch
    %1499 = sbr.rel (0) target = $region45
  $region44: #{recommender_forward.1} parent=0 // pred_region
    _
  $region45: #{recommender_forward.1} parent=0 // pred_fallthru
    _
  // Predicated region
  $region46: #{recommender_forward.1} parent=0 // pred_check
    _
  $region47: #{recommender_forward.1} parent=0 // pred_check_branch
    %1501 = sbr.rel (0) target = $region49
  $region48: #{recommender_forward.1} parent=0 // pred_region
    _
  $region49: #{recommender_forward.1} parent=0 // pred_fallthru
    _

</llo_original>
